<compile_context>
chip_gen: v5e
topology: v5e:2x2
jax: 0.10.0
libtpu: 0.0.40
codegen_flags: <defaults>
</compile_context>

<pallas_src>
import functools

import numpy as np
import jax
import jax.numpy as jnp
from jax import lax
from jax.experimental import pallas as pl
from jax.experimental.pallas import tpu as pltpu


# ----------------------------------------------------------------------------
# Host-side weight folding: KW taps + W-direction zero padding of a KHxKW
# "same" conv folded into a single K-stacked matrix (KH*W*Cin, W*Cout).
# ----------------------------------------------------------------------------
def _band_matrix(w, width, padding):
    KH, KW, Cin, Cout = w.shape
    wi = jnp.arange(width)[:, None]            # input column index
    wo = jnp.arange(width)[None, :]            # output column index
    dx = wi - wo + padding                     # kernel tap linking them
    valid = ((dx >= 0) & (dx < KW)).astype(w.dtype)
    dxc = jnp.clip(dx, 0, KW - 1)
    blocks = w[:, dxc] * valid[None, :, :, None, None]     # (KH, wi, wo, Cin, Cout)
    m = blocks.transpose(0, 1, 3, 2, 4).reshape(KH, width * Cin, width * Cout)
    return m.reshape(KH * width * Cin, width * Cout)        # dy-major K stacking


# ----------------------------------------------------------------------------
# Host-side constant 0/1 selectors for the fused 2x2/stride-2 max-pool that
# directly produce the lane-dense packed output (Ho//pack, pack*Wo*Cout).
#   out[r, c] = pooled[pack*r + c // (Wo*Cout), c % (Wo*Cout)]
# ----------------------------------------------------------------------------
def _pool_selectors(H, W, Cout, pack):
    Ho, Wo = H // 2, W // 2
    Hp, WoC, WC = Ho // pack, Wo * Cout, W * Cout
    r = np.arange(Hp)[:, None]
    h = np.arange(H)[None, :]
    k = np.arange(WC)[:, None]
    c = np.arange(pack * WoC)[None, :]
    j = c % WoC
    rows, cols = [], []
    for q in range(pack):
        for p in (0, 1):
            # row selector: picks y2 row 2*(pack*r + q) + p into packed row r
            rows.append((h == 2 * (pack * r + q) + p).astype(np.float32))
            # col selector: picks y2 lane for w = 2*(j//Cout)+p, channel j%Cout,
            # and places it into lane chunk q of the packed output row.
            cols.append(((c // WoC == q)
                         & (k == (2 * (j // Cout) + p) * Cout + (j % Cout))
                         ).astype(np.float32))
    return np.stack(rows), np.stack(cols)   # (2*pack, Hp, H), (2*pack, WC, pack*WoC)


# ----------------------------------------------------------------------------
# Fused kernel: one batch sample per grid step.
# ----------------------------------------------------------------------------
def _encoder_kernel(x_ref, m1_ref, m2_ref, pp1_ref, pp2_ref,
                    rowsel_ref, colsel_ref, o_trace_ref, o_pool_ref,
                    *, H, W, Cin, Cout, KH, pad, eps, pack):
    f32 = jnp.float32

    def shift_stack(a2d, cin):
        # (H, KH*W*cin): lane-concatenated, row-shifted (zero-padded in H) copies.
        # Rolls ride the XLU; the wrapped-row masks are a couple of VPU selects.
        wc = W * cin
        row = lax.broadcasted_iota(jnp.int32, (H, wc), 0)
        parts = []
        for dy in range(KH):
            s = pad - dy                       # shifted[h] = a2d[h - s] (0 outside)
            if s == 0:
                parts.append(a2d)
            else:
                rolled = pltpu.roll(a2d, shift=s % H, axis=0)
                valid = (row >= s) if s > 0 else (row < H + s)
                parts.append(jnp.where(valid, rolled, 0.0))
        return jnp.concatenate(parts, axis=1)

    def conv_gn_relu(a2d, m_ref, pp_ref, cin):
        # Whole 3x3 conv = ONE K-stacked bf16 MXU matmul (K = KH*W*cin), f32 acc.
        stacked = shift_stack(a2d, cin).astype(jnp.bfloat16)
        y = jnp.dot(stacked, m_ref[...], preferred_element_type=f32)    # (H, W*Cout)
        pp = pp_ref[...]                       # (3, W*Cout): bias / gamma / beta rows
        y = y + pp[0:1, :]                     # conv bias
        # GroupNorm(num_groups=1): two-pass stats in f32 over the whole sample.
        n = float(H * W * Cout)
        mean = jnp.sum(y) / n
        d = y - mean
        var = jnp.sum(d * d) / n
        y = d * lax.rsqrt(var + eps)
        y = y * pp[1:2, :] + pp[2:3, :]        # per-channel affine (tiled over W lanes)
        return jnp.maximum(y, 0.0)             # ReLU

    x2d = x_ref[0]                                         # (H, W*Cin), lane-dense
    y1 = conv_gn_relu(x2d, m1_ref, pp1_ref, Cin)           # (H, W*Cout)
    y2 = conv_gn_relu(y1, m2_ref, pp2_ref, Cout)           # (H, W*Cout)
    o_trace_ref[0] = y2                                    # dense 128-lane store

    # ---- fused 2x2 / stride-2 max-pool, lane-dense packed output ---------------
    # out (Hp, pack*WoC): all selectors are host-precomputed constants (f32 exact).
    Hp = (H // 2) // pack
    WoC = (W // 2) * Cout
    out = jnp.zeros((Hp, pack * WoC), f32)
    for q in range(pack):
        re = rowsel_ref[2 * q]         # (Hp, H)  -> y2 row 2*(pack*r + q)
        ro = rowsel_ref[2 * q + 1]     # (Hp, H)  -> y2 row 2*(pack*r + q) + 1
        half = jnp.maximum(jnp.dot(re, y2, preferred_element_type=f32),
                           jnp.dot(ro, y2, preferred_element_type=f32))   # (Hp, W*Cout)
        ce = colsel_ref[2 * q]         # (W*Cout, pack*WoC)  even-w taps -> chunk q
        co = colsel_ref[2 * q + 1]     # (W*Cout, pack*WoC)  odd-w taps  -> chunk q
        out = out + jnp.maximum(jnp.dot(half, ce, preferred_element_type=f32),
                                jnp.dot(half, co, preferred_element_type=f32))
    o_pool_ref[0] = out


# ----------------------------------------------------------------------------
# StackEncoder_norm forward.  x is NCHW (like the PyTorch module); conv weights
# are HWIO (KH, KW, Cin, Cout).  Returns (pooled_NCHW, trace_NCHW).
# ----------------------------------------------------------------------------
def stack_encoder_norm(x_nchw, params, padding=1, eps=1e-5):
    B, Cin, H, W = x_nchw.shape
    KH, KW, _, Cout = params["w1"].shape
    assert KH % 2 == 1 and KW % 2 == 1 and padding == KH // 2 == KW // 2, \
        "band-matrix formulation assumes a 'same' convolution (module uses padding=1, 3x3)"
    assert H % 2 == 0 and W % 2 == 0
    Ho, Wo = H // 2, W // 2
    WoC = Wo * Cout

    # Lane-dense packing factor for the pooled output (dense vst, not vst.msk).
    if WoC % 128 == 0:
        pack = 1
    elif 128 % WoC == 0 and Ho % (128 // WoC) == 0:
        pack = 128 // WoC
    else:
        pack = 1
    Hp = Ho // pack

    # Layout plumbing + weight folding (tiny XLA work, once per call).
    # TODO(synk): at production U-Net sizes the (W*C)^2 band matrices blow VMEM
    # (v7x 64 MiB first) -- switch to an H-tiled im2col pipeline with two-pass GN.
    x2d = jnp.transpose(x_nchw, (0, 2, 3, 1)).astype(jnp.float32).reshape(B, H, W * Cin)
    m1 = _band_matrix(params["w1"].astype(jnp.float32), W, padding).astype(jnp.bfloat16)
    m2 = _band_matrix(params["w2"].astype(jnp.float32), W, padding).astype(jnp.bfloat16)
    pp1 = jnp.stack([jnp.tile(params["b1"], W), jnp.tile(params["g1"], W),
                     jnp.tile(params["be1"], W)]).astype(jnp.float32)    # (3, W*Cout)
    pp2 = jnp.stack([jnp.tile(params["b2"], W), jnp.tile(params["g2"], W),
                     jnp.tile(params["be2"], W)]).astype(jnp.float32)    # (3, W*Cout)
    rowsel, colsel = _pool_selectors(H, W, Cout, pack)   # compile-time constants

    kernel = functools.partial(_encoder_kernel, H=H, W=W, Cin=Cin, Cout=Cout,
                               KH=KH, pad=padding, eps=eps, pack=pack)

    # NOTE: m1/m2/pp/selector blocks are grid-invariant; at large W*C they should be
    # single-buffered (pipeline_mode=pl.Buffered(1)) to halve their VMEM footprint.
    # NOTE: on single-TC chips (v5e/v6e) folding B into the matmul M dimension
    # (grid=(1,), per-sample GN via segmented stats) removes per-step overhead;
    # grid=(B,) "parallel" is kept so v7x's two TensorCores both get work.
    trace2d, pool_packed = pl.pallas_call(
        kernel,
        out_shape=(jax.ShapeDtypeStruct((B, H, W * Cout), jnp.float32),
                   jax.ShapeDtypeStruct((B, Hp, pack * WoC), jnp.float32)),
        grid=(B,),
        in_specs=[
            pl.BlockSpec((1, H, W * Cin), lambda i: (i, 0, 0)),
            pl.BlockSpec((KH * W * Cin, W * Cout), lambda i: (0, 0)),
            pl.BlockSpec((KH * W * Cout, W * Cout), lambda i: (0, 0)),
            pl.BlockSpec((3, W * Cout), lambda i: (0, 0)),
            pl.BlockSpec((3, W * Cout), lambda i: (0, 0)),
            pl.BlockSpec((2 * pack, Hp, H), lambda i: (0, 0, 0)),
            pl.BlockSpec((2 * pack, W * Cout, pack * WoC), lambda i: (0, 0, 0)),
        ],
        out_specs=(
            pl.BlockSpec((1, H, W * Cout), lambda i: (i, 0, 0)),
            pl.BlockSpec((1, Hp, pack * WoC), lambda i: (i, 0, 0)),
        ),
        compiler_params=pltpu.CompilerParams(dimension_semantics=("parallel",)),
    )(x2d, m1, m2, pp1, pp2, rowsel, colsel)

    x_trace = trace2d.reshape(B, H, W, Cout)
    x_pool = pool_packed.reshape(B, Ho, Wo, Cout)        # free un-packing reshape
    return (jnp.transpose(x_pool, (0, 3, 1, 2)),         # NCHW, like the module
            jnp.transpose(x_trace, (0, 3, 1, 2)))


# ----------------------------------------------------------------------------
# Pure-JAX reference (correctness check only).
# ----------------------------------------------------------------------------
def _ref_conv_gn_relu(x, w, b, gamma, beta, padding=1, eps=1e-5):
    y = lax.conv_general_dilated(
        x, w, window_strides=(1, 1),
        padding=((padding, padding), (padding, padding)),
        dimension_numbers=("NHWC", "HWIO", "NHWC"),
        precision=lax.Precision.HIGHEST) + b.reshape(1, 1, 1, -1)
    mean = y.mean(axis=(1, 2, 3), keepdims=True)
    var = ((y - mean) ** 2).mean(axis=(1, 2, 3), keepdims=True)
    y = (y - mean) / jnp.sqrt(var + eps)
    y = y * gamma.reshape(1, 1, 1, -1) + beta.reshape(1, 1, 1, -1)
    return jnp.maximum(y, 0.0)


def _ref_forward(x_nchw, params, padding=1):
    x = jnp.transpose(x_nchw, (0, 2, 3, 1))
    y = _ref_conv_gn_relu(x, params["w1"], params["b1"], params["g1"], params["be1"], padding)
    y = _ref_conv_gn_relu(y, params["w2"], params["b2"], params["g2"], params["be2"], padding)
    B, H, W, C = y.shape
    pooled = y.reshape(B, H // 2, 2, W // 2, 2, C).max(axis=(2, 4))
    return (jnp.transpose(pooled, (0, 3, 1, 2)),
            jnp.transpose(y, (0, 3, 1, 2)))


if __name__ == "__main__":
    # Shapes consistent with the module: NCHW (2, 4, 16, 16), out_channels = 8.
    B, Cin, Cout, H, W = 2, 4, 8, 16, 16
    padding = 1

    key = jax.random.PRNGKey(0)
    k = jax.random.split(key, 9)
    params = {
        "w1": jax.random.normal(k[0], (3, 3, Cin, Cout), jnp.float32) * 0.1,
        "b1": jax.random.normal(k[1], (Cout,), jnp.float32) * 0.1,
        "g1": 1.0 + 0.1 * jax.random.normal(k[2], (Cout,), jnp.float32),
        "be1": 0.1 * jax.random.normal(k[3], (Cout,), jnp.float32),
        "w2": jax.random.normal(k[4], (3, 3, Cout, Cout), jnp.float32) * 0.1,
        "b2": jax.random.normal(k[5], (Cout,), jnp.float32) * 0.1,
        "g2": 1.0 + 0.1 * jax.random.normal(k[6], (Cout,), jnp.float32),
        "be2": 0.1 * jax.random.normal(k[7], (Cout,), jnp.float32),
    }
    x = jax.random.normal(k[8], (B, Cin, H, W), jnp.float32)

    fwd = jax.jit(functools.partial(stack_encoder_norm, padding=padding))
    pooled, trace = fwd(x, params)
    pooled = jax.block_until_ready(pooled)
    trace = jax.block_until_ready(trace)

    ref_pooled, ref_trace = _ref_forward(x, params, padding=padding)
    assert pooled.shape == (B, Cout, H // 2, W // 2)
    assert trace.shape == (B, Cout, H, W)

    # Tolerance set by bf16 operand rounding in the conv matmuls (review-requested
    # optimization); GN/affine/ReLU/pool stay f32.
    tol = 3e-2
    assert jnp.allclose(trace, ref_trace, atol=tol, rtol=tol), \
        float(jnp.max(jnp.abs(trace - ref_trace)))
    assert jnp.allclose(pooled, ref_pooled, atol=tol, rtol=tol), \
        float(jnp.max(jnp.abs(pooled - ref_pooled)))

    # Tight structural check of the fused/packed pooling epilogue: pooled must be
    # the exact 2x2 max-pool of the kernel's own trace output.
    t_nhwc = jnp.transpose(trace, (0, 2, 3, 1))
    pool_from_trace = t_nhwc.reshape(B, H // 2, 2, W // 2, 2, Cout).max(axis=(2, 4))
    pool_from_trace = jnp.transpose(pool_from_trace, (0, 3, 1, 2))
    assert jnp.allclose(pooled, pool_from_trace, atol=1e-5, rtol=1e-5), \
        float(jnp.max(jnp.abs(pooled - pool_from_trace)))

    print("KERNEL_OK")
</pallas_src>

<mosaic_0001>
module attributes {stable_mosaic.version = 11 : i64} {
  func.func @_encoder_kernel(%arg0: i32, %arg1: memref<1x16x64xf32, #tpu.memory_space<vmem>>, %arg2: memref<192x128xbf16, #tpu.memory_space<vmem>>, %arg3: memref<384x128xbf16, #tpu.memory_space<vmem>>, %arg4: memref<3x128xf32, #tpu.memory_space<vmem>>, %arg5: memref<3x128xf32, #tpu.memory_space<vmem>>, %arg6: memref<4x4x16xf32, #tpu.memory_space<vmem>>, %arg7: memref<4x128x128xf32, #tpu.memory_space<vmem>>, %arg8: memref<1x16x128xf32, #tpu.memory_space<vmem>>, %arg9: memref<1x4x128xf32, #tpu.memory_space<vmem>>) attributes {dimension_semantics = [#tpu.dimension_semantics<parallel>], iteration_bounds = array<i64: 2>, scalar_prefetch = 0 : i64, scratch_operands = 0 : i64, tpu.core_type = #tpu.core_type<tc>, window_params = [{transform_indices = @transform_0, window_bounds = array<i64: 1, 16, 64>}, {pipeline_mode = #tpu.pipeline_mode<synchronous>, transform_indices = @transform_1, window_bounds = array<i64: 192, 128>}, {pipeline_mode = #tpu.pipeline_mode<synchronous>, transform_indices = @transform_2, window_bounds = array<i64: 384, 128>}, {pipeline_mode = #tpu.pipeline_mode<synchronous>, transform_indices = @transform_3, window_bounds = array<i64: 3, 128>}, {pipeline_mode = #tpu.pipeline_mode<synchronous>, transform_indices = @transform_4, window_bounds = array<i64: 3, 128>}, {pipeline_mode = #tpu.pipeline_mode<synchronous>, transform_indices = @transform_5, window_bounds = array<i64: 4, 4, 16>}, {pipeline_mode = #tpu.pipeline_mode<synchronous>, transform_indices = @transform_6, window_bounds = array<i64: 4, 128, 128>}, {transform_indices = @transform_7, window_bounds = array<i64: 1, 16, 128>}, {transform_indices = @transform_8, window_bounds = array<i64: 1, 4, 128>}]} {
    %c0 = arith.constant 0 : index
    %c0_0 = arith.constant 0 : index
    %c0_1 = arith.constant 0 : index
    %0 = vector.load %arg1[%c0, %c0_0, %c0_1] : memref<1x16x64xf32, #tpu.memory_space<vmem>>, vector<1x16x64xf32>
    %1 = vector.shape_cast %0 : vector<1x16x64xf32> to vector<16x64xf32>
    %2 = tpu.iota {dimensions = array<i32: 0>} : vector<16x64xi32>
    %c1_i32 = arith.constant 1 : i32
    %3 = tpu.dynamic_rotate %1 by %c1_i32 dim 0 : vector<16x64xf32>, i32 -> vector<16x64xf32>
    %c1_i32_2 = arith.constant 1 : i32
    %4 = vector.broadcast %c1_i32_2 : i32 to vector<16x64xi32>
    %5 = arith.cmpi sge, %2, %4 : vector<16x64xi32>
    %cst = arith.constant 0.000000e+00 : f32
    %6 = vector.broadcast %cst : f32 to vector<16x64xf32>
    %7 = arith.select %5, %3, %6 : vector<16x64xi1>, vector<16x64xf32>
    %c15_i32 = arith.constant 15 : i32
    %8 = tpu.dynamic_rotate %1 by %c15_i32 dim 0 : vector<16x64xf32>, i32 -> vector<16x64xf32>
    %c15_i32_3 = arith.constant 15 : i32
    %9 = vector.broadcast %c15_i32_3 : i32 to vector<16x64xi32>
    %10 = arith.cmpi slt, %2, %9 : vector<16x64xi32>
    %cst_4 = arith.constant 0.000000e+00 : f32
    %11 = vector.broadcast %cst_4 : f32 to vector<16x64xf32>
    %12 = arith.select %10, %8, %11 : vector<16x64xi1>, vector<16x64xf32>
    %13 = tpu.concatenate %7, %1, %12 in 1 : vector<16x64xf32>, vector<16x64xf32>, vector<16x64xf32> -> vector<16x192xf32>
    %14 = arith.truncf %13 : vector<16x192xf32> to vector<16x192xbf16>
    %c0_5 = arith.constant 0 : index
    %c0_6 = arith.constant 0 : index
    %15 = vector.load %arg2[%c0_5, %c0_6] : memref<192x128xbf16, #tpu.memory_space<vmem>>, vector<192x128xbf16>
    %cst_7 = arith.constant dense<0.000000e+00> : vector<16x128xf32>
    %16 = tpu.matmul %14, %15, %cst_7 {dimension_numbers = #tpu.dot_dimension_numbers<[1], [0], [0], [1], [0, 0, 1, 1], [], []>} : vector<16x192xbf16>, vector<192x128xbf16>, vector<16x128xf32> -> vector<16x128xf32>
    %c0_8 = arith.constant 0 : index
    %c0_9 = arith.constant 0 : index
    %17 = vector.load %arg4[%c0_8, %c0_9] : memref<3x128xf32, #tpu.memory_space<vmem>>, vector<3x128xf32>
    %18 = vector.extract_strided_slice %17 {offsets = [0, 0], sizes = [1, 128], strides = [1, 1]} : vector<3x128xf32> to vector<1x128xf32>
    %19 = vector.broadcast %18 : vector<1x128xf32> to vector<16x128xf32>
    %20 = arith.addf %16, %19 : vector<16x128xf32>
    %21 = vector.shape_cast %20 : vector<16x128xf32> to vector<1x16x128xf32>
    %cst_10 = arith.constant dense<0.000000e+00> : vector<1xf32>
    %22 = vector.multi_reduction <add>, %21, %cst_10 [1, 2] : vector<1x16x128xf32> to vector<1xf32>
    %23 = vector.shape_cast %22 : vector<1xf32> to vector<1x1x1xf32>
    %24 = vector.extract %23[0, 0, 0] : f32 from vector<1x1x1xf32>
    %cst_11 = arith.constant 2.048000e+03 : f32
    %25 = arith.divf %24, %cst_11 : f32
    %26 = vector.broadcast %25 : f32 to vector<16x128xf32>
    %27 = arith.subf %20, %26 : vector<16x128xf32>
    %28 = arith.mulf %27, %27 : vector<16x128xf32>
    %29 = vector.shape_cast %28 : vector<16x128xf32> to vector<1x16x128xf32>
    %cst_12 = arith.constant dense<0.000000e+00> : vector<1xf32>
    %30 = vector.multi_reduction <add>, %29, %cst_12 [1, 2] : vector<1x16x128xf32> to vector<1xf32>
    %31 = vector.shape_cast %30 : vector<1xf32> to vector<1x1x1xf32>
    %32 = vector.extract %31[0, 0, 0] : f32 from vector<1x1x1xf32>
    %cst_13 = arith.constant 2.048000e+03 : f32
    %33 = arith.divf %32, %cst_13 : f32
    %cst_14 = arith.constant 9.99999974E-6 : f32
    %34 = arith.addf %33, %cst_14 : f32
    %35 = math.rsqrt %34 : f32
    %36 = vector.broadcast %35 : f32 to vector<16x128xf32>
    %37 = arith.mulf %27, %36 : vector<16x128xf32>
    %38 = vector.extract_strided_slice %17 {offsets = [1, 0], sizes = [1, 128], strides = [1, 1]} : vector<3x128xf32> to vector<1x128xf32>
    %39 = vector.broadcast %38 : vector<1x128xf32> to vector<16x128xf32>
    %40 = arith.mulf %37, %39 : vector<16x128xf32>
    %41 = vector.extract_strided_slice %17 {offsets = [2, 0], sizes = [1, 128], strides = [1, 1]} : vector<3x128xf32> to vector<1x128xf32>
    %42 = vector.broadcast %41 : vector<1x128xf32> to vector<16x128xf32>
    %43 = arith.addf %40, %42 : vector<16x128xf32>
    %cst_15 = arith.constant 0.000000e+00 : f32
    %44 = vector.broadcast %cst_15 : f32 to vector<16x128xf32>
    %45 = arith.maximumf %43, %44 : vector<16x128xf32>
    %46 = tpu.iota {dimensions = array<i32: 0>} : vector<16x128xi32>
    %c1_i32_16 = arith.constant 1 : i32
    %47 = tpu.dynamic_rotate %45 by %c1_i32_16 dim 0 : vector<16x128xf32>, i32 -> vector<16x128xf32>
    %c1_i32_17 = arith.constant 1 : i32
    %48 = vector.broadcast %c1_i32_17 : i32 to vector<16x128xi32>
    %49 = arith.cmpi sge, %46, %48 : vector<16x128xi32>
    %cst_18 = arith.constant 0.000000e+00 : f32
    %50 = vector.broadcast %cst_18 : f32 to vector<16x128xf32>
    %51 = arith.select %49, %47, %50 : vector<16x128xi1>, vector<16x128xf32>
    %c15_i32_19 = arith.constant 15 : i32
    %52 = tpu.dynamic_rotate %45 by %c15_i32_19 dim 0 : vector<16x128xf32>, i32 -> vector<16x128xf32>
    %c15_i32_20 = arith.constant 15 : i32
    %53 = vector.broadcast %c15_i32_20 : i32 to vector<16x128xi32>
    %54 = arith.cmpi slt, %46, %53 : vector<16x128xi32>
    %cst_21 = arith.constant 0.000000e+00 : f32
    %55 = vector.broadcast %cst_21 : f32 to vector<16x128xf32>
    %56 = arith.select %54, %52, %55 : vector<16x128xi1>, vector<16x128xf32>
    %57 = tpu.concatenate %51, %45, %56 in 1 : vector<16x128xf32>, vector<16x128xf32>, vector<16x128xf32> -> vector<16x384xf32>
    %58 = arith.truncf %57 : vector<16x384xf32> to vector<16x384xbf16>
    %c0_22 = arith.constant 0 : index
    %c0_23 = arith.constant 0 : index
    %59 = vector.load %arg3[%c0_22, %c0_23] : memref<384x128xbf16, #tpu.memory_space<vmem>>, vector<384x128xbf16>
    %cst_24 = arith.constant dense<0.000000e+00> : vector<16x128xf32>
    %60 = tpu.matmul %58, %59, %cst_24 {dimension_numbers = #tpu.dot_dimension_numbers<[1], [0], [0], [1], [0, 0, 1, 1], [], []>} : vector<16x384xbf16>, vector<384x128xbf16>, vector<16x128xf32> -> vector<16x128xf32>
    %c0_25 = arith.constant 0 : index
    %c0_26 = arith.constant 0 : index
    %61 = vector.load %arg5[%c0_25, %c0_26] : memref<3x128xf32, #tpu.memory_space<vmem>>, vector<3x128xf32>
    %62 = vector.extract_strided_slice %61 {offsets = [0, 0], sizes = [1, 128], strides = [1, 1]} : vector<3x128xf32> to vector<1x128xf32>
    %63 = vector.broadcast %62 : vector<1x128xf32> to vector<16x128xf32>
    %64 = arith.addf %60, %63 : vector<16x128xf32>
    %65 = vector.shape_cast %64 : vector<16x128xf32> to vector<1x16x128xf32>
    %cst_27 = arith.constant dense<0.000000e+00> : vector<1xf32>
    %66 = vector.multi_reduction <add>, %65, %cst_27 [1, 2] : vector<1x16x128xf32> to vector<1xf32>
    %67 = vector.shape_cast %66 : vector<1xf32> to vector<1x1x1xf32>
    %68 = vector.extract %67[0, 0, 0] : f32 from vector<1x1x1xf32>
    %cst_28 = arith.constant 2.048000e+03 : f32
    %69 = arith.divf %68, %cst_28 : f32
    %70 = vector.broadcast %69 : f32 to vector<16x128xf32>
    %71 = arith.subf %64, %70 : vector<16x128xf32>
    %72 = arith.mulf %71, %71 : vector<16x128xf32>
    %73 = vector.shape_cast %72 : vector<16x128xf32> to vector<1x16x128xf32>
    %cst_29 = arith.constant dense<0.000000e+00> : vector<1xf32>
    %74 = vector.multi_reduction <add>, %73, %cst_29 [1, 2] : vector<1x16x128xf32> to vector<1xf32>
    %75 = vector.shape_cast %74 : vector<1xf32> to vector<1x1x1xf32>
    %76 = vector.extract %75[0, 0, 0] : f32 from vector<1x1x1xf32>
    %cst_30 = arith.constant 2.048000e+03 : f32
    %77 = arith.divf %76, %cst_30 : f32
    %cst_31 = arith.constant 9.99999974E-6 : f32
    %78 = arith.addf %77, %cst_31 : f32
    %79 = math.rsqrt %78 : f32
    %80 = vector.broadcast %79 : f32 to vector<16x128xf32>
    %81 = arith.mulf %71, %80 : vector<16x128xf32>
    %82 = vector.extract_strided_slice %61 {offsets = [1, 0], sizes = [1, 128], strides = [1, 1]} : vector<3x128xf32> to vector<1x128xf32>
    %83 = vector.broadcast %82 : vector<1x128xf32> to vector<16x128xf32>
    %84 = arith.mulf %81, %83 : vector<16x128xf32>
    %85 = vector.extract_strided_slice %61 {offsets = [2, 0], sizes = [1, 128], strides = [1, 1]} : vector<3x128xf32> to vector<1x128xf32>
    %86 = vector.broadcast %85 : vector<1x128xf32> to vector<16x128xf32>
    %87 = arith.addf %84, %86 : vector<16x128xf32>
    %cst_32 = arith.constant 0.000000e+00 : f32
    %88 = vector.broadcast %cst_32 : f32 to vector<16x128xf32>
    %89 = arith.maximumf %87, %88 : vector<16x128xf32>
    %c0_33 = arith.constant 0 : index
    %c0_34 = arith.constant 0 : index
    %c0_35 = arith.constant 0 : index
    %90 = vector.load %arg8[%c0_33, %c0_34, %c0_35] : memref<1x16x128xf32, #tpu.memory_space<vmem>>, vector<1x16x128xf32>
    %91 = vector.shape_cast %90 : vector<1x16x128xf32> to vector<16x128xf32>
    %92 = vector.shape_cast %89 : vector<16x128xf32> to vector<1x16x128xf32>
    tpu.vector_store %arg8[%c0_33, %c0_34, %c0_35], %92 {strides = array<i32>} : memref<1x16x128xf32, #tpu.memory_space<vmem>>, vector<1x16x128xf32>,
    %cst_36 = arith.constant 0.000000e+00 : f32
    %93 = vector.broadcast %cst_36 : f32 to vector<4x128xf32>
    %c0_37 = arith.constant 0 : index
    %c0_38 = arith.constant 0 : index
    %c0_39 = arith.constant 0 : index
    %94 = vector.load %arg6[%c0_37, %c0_38, %c0_39] : memref<4x4x16xf32, #tpu.memory_space<vmem>>, vector<1x4x16xf32>
    %95 = vector.shape_cast %94 : vector<1x4x16xf32> to vector<4x16xf32>
    %c1 = arith.constant 1 : index
    %c0_40 = arith.constant 0 : index
    %c0_41 = arith.constant 0 : index
    %96 = vector.load %arg6[%c1, %c0_40, %c0_41] : memref<4x4x16xf32, #tpu.memory_space<vmem>>, vector<1x4x16xf32>
    %97 = vector.shape_cast %96 : vector<1x4x16xf32> to vector<4x16xf32>
    %cst_42 = arith.constant dense<0.000000e+00> : vector<4x128xf32>
    %98 = tpu.matmul %95, %89, %cst_42 {dimension_numbers = #tpu.dot_dimension_numbers<[1], [0], [0], [1], [0, 0, 1, 1], [], []>} : vector<4x16xf32>, vector<16x128xf32>, vector<4x128xf32> -> vector<4x128xf32>
    %cst_43 = arith.constant dense<0.000000e+00> : vector<4x128xf32>
    %99 = tpu.matmul %97, %89, %cst_43 {dimension_numbers = #tpu.dot_dimension_numbers<[1], [0], [0], [1], [0, 0, 1, 1], [], []>} : vector<4x16xf32>, vector<16x128xf32>, vector<4x128xf32> -> vector<4x128xf32>
    %100 = arith.maximumf %98, %99 : vector<4x128xf32>
    %c0_44 = arith.constant 0 : index
    %c0_45 = arith.constant 0 : index
    %c0_46 = arith.constant 0 : index
    %101 = vector.load %arg7[%c0_44, %c0_45, %c0_46] : memref<4x128x128xf32, #tpu.memory_space<vmem>>, vector<1x128x128xf32>
    %102 = vector.shape_cast %101 : vector<1x128x128xf32> to vector<128x128xf32>
    %c1_47 = arith.constant 1 : index
    %c0_48 = arith.constant 0 : index
    %c0_49 = arith.constant 0 : index
    %103 = vector.load %arg7[%c1_47, %c0_48, %c0_49] : memref<4x128x128xf32, #tpu.memory_space<vmem>>, vector<1x128x128xf32>
    %104 = vector.shape_cast %103 : vector<1x128x128xf32> to vector<128x128xf32>
    %cst_50 = arith.constant dense<0.000000e+00> : vector<4x128xf32>
    %105 = tpu.matmul %100, %102, %cst_50 {dimension_numbers = #tpu.dot_dimension_numbers<[1], [0], [0], [1], [0, 0, 1, 1], [], []>} : vector<4x128xf32>, vector<128x128xf32>, vector<4x128xf32> -> vector<4x128xf32>
    %cst_51 = arith.constant dense<0.000000e+00> : vector<4x128xf32>
    %106 = tpu.matmul %100, %104, %cst_51 {dimension_numbers = #tpu.dot_dimension_numbers<[1], [0], [0], [1], [0, 0, 1, 1], [], []>} : vector<4x128xf32>, vector<128x128xf32>, vector<4x128xf32> -> vector<4x128xf32>
    %107 = arith.maximumf %105, %106 : vector<4x128xf32>
    %108 = arith.addf %93, %107 : vector<4x128xf32>
    %c2 = arith.constant 2 : index
    %c0_52 = arith.constant 0 : index
    %c0_53 = arith.constant 0 : index
    %109 = vector.load %arg6[%c2, %c0_52, %c0_53] : memref<4x4x16xf32, #tpu.memory_space<vmem>>, vector<1x4x16xf32>
    %110 = vector.shape_cast %109 : vector<1x4x16xf32> to vector<4x16xf32>
    %c3 = arith.constant 3 : index
    %c0_54 = arith.constant 0 : index
    %c0_55 = arith.constant 0 : index
    %111 = vector.load %arg6[%c3, %c0_54, %c0_55] : memref<4x4x16xf32, #tpu.memory_space<vmem>>, vector<1x4x16xf32>
    %112 = vector.shape_cast %111 : vector<1x4x16xf32> to vector<4x16xf32>
    %cst_56 = arith.constant dense<0.000000e+00> : vector<4x128xf32>
    %113 = tpu.matmul %110, %89, %cst_56 {dimension_numbers = #tpu.dot_dimension_numbers<[1], [0], [0], [1], [0, 0, 1, 1], [], []>} : vector<4x16xf32>, vector<16x128xf32>, vector<4x128xf32> -> vector<4x128xf32>
    %cst_57 = arith.constant dense<0.000000e+00> : vector<4x128xf32>
    %114 = tpu.matmul %112, %89, %cst_57 {dimension_numbers = #tpu.dot_dimension_numbers<[1], [0], [0], [1], [0, 0, 1, 1], [], []>} : vector<4x16xf32>, vector<16x128xf32>, vector<4x128xf32> -> vector<4x128xf32>
    %115 = arith.maximumf %113, %114 : vector<4x128xf32>
    %c2_58 = arith.constant 2 : index
    %c0_59 = arith.constant 0 : index
    %c0_60 = arith.constant 0 : index
    %116 = vector.load %arg7[%c2_58, %c0_59, %c0_60] : memref<4x128x128xf32, #tpu.memory_space<vmem>>, vector<1x128x128xf32>
    %117 = vector.shape_cast %116 : vector<1x128x128xf32> to vector<128x128xf32>
    %c3_61 = arith.constant 3 : index
    %c0_62 = arith.constant 0 : index
    %c0_63 = arith.constant 0 : index
    %118 = vector.load %arg7[%c3_61, %c0_62, %c0_63] : memref<4x128x128xf32, #tpu.memory_space<vmem>>, vector<1x128x128xf32>
    %119 = vector.shape_cast %118 : vector<1x128x128xf32> to vector<128x128xf32>
    %cst_64 = arith.constant dense<0.000000e+00> : vector<4x128xf32>
    %120 = tpu.matmul %115, %117, %cst_64 {dimension_numbers = #tpu.dot_dimension_numbers<[1], [0], [0], [1], [0, 0, 1, 1], [], []>} : vector<4x128xf32>, vector<128x128xf32>, vector<4x128xf32> -> vector<4x128xf32>
    %cst_65 = arith.constant dense<0.000000e+00> : vector<4x128xf32>
    %121 = tpu.matmul %115, %119, %cst_65 {dimension_numbers = #tpu.dot_dimension_numbers<[1], [0], [0], [1], [0, 0, 1, 1], [], []>} : vector<4x128xf32>, vector<128x128xf32>, vector<4x128xf32> -> vector<4x128xf32>
    %122 = arith.maximumf %120, %121 : vector<4x128xf32>
    %123 = arith.addf %108, %122 : vector<4x128xf32>
    %c0_66 = arith.constant 0 : index
    %c0_67 = arith.constant 0 : index
    %c0_68 = arith.constant 0 : index
    %124 = vector.load %arg9[%c0_66, %c0_67, %c0_68] : memref<1x4x128xf32, #tpu.memory_space<vmem>>, vector<1x4x128xf32>
    %125 = vector.shape_cast %124 : vector<1x4x128xf32> to vector<4x128xf32>
    %126 = vector.shape_cast %123 : vector<4x128xf32> to vector<1x4x128xf32>
    tpu.vector_store %arg9[%c0_66, %c0_67, %c0_68], %126 {strides = array<i32>} : memref<1x4x128xf32, #tpu.memory_space<vmem>>, vector<1x4x128xf32>,
    return
  }
  func.func @transform_0(%arg0: i32) -> (i32, i32, i32) {
    %c0_i32 = arith.constant 0 : i32
    %c0_i32_0 = arith.constant 0 : i32
    %c0_i32_1 = arith.constant 0 : i32
    return %arg0, %c0_i32, %c0_i32_0 : i32, i32, i32
  }
  func.func @transform_1(%arg0: i32) -> (i32, i32) {
    %c0_i32 = arith.constant 0 : i32
    %c0_i32_0 = arith.constant 0 : i32
    %c0_i32_1 = arith.constant 0 : i32
    return %c0_i32, %c0_i32_0 : i32, i32
  }
  func.func @transform_2(%arg0: i32) -> (i32, i32) {
    %c0_i32 = arith.constant 0 : i32
    %c0_i32_0 = arith.constant 0 : i32
    %c0_i32_1 = arith.constant 0 : i32
    return %c0_i32, %c0_i32_0 : i32, i32
  }
  func.func @transform_3(%arg0: i32) -> (i32, i32) {
    %c0_i32 = arith.constant 0 : i32
    %c0_i32_0 = arith.constant 0 : i32
    %c0_i32_1 = arith.constant 0 : i32
    return %c0_i32, %c0_i32_0 : i32, i32
  }
  func.func @transform_4(%arg0: i32) -> (i32, i32) {
    %c0_i32 = arith.constant 0 : i32
    %c0_i32_0 = arith.constant 0 : i32
    %c0_i32_1 = arith.constant 0 : i32
    return %c0_i32, %c0_i32_0 : i32, i32
  }
  func.func @transform_5(%arg0: i32) -> (i32, i32, i32) {
    %c0_i32 = arith.constant 0 : i32
    %c0_i32_0 = arith.constant 0 : i32
    %c0_i32_1 = arith.constant 0 : i32
    %c0_i32_2 = arith.constant 0 : i32
    return %c0_i32, %c0_i32_0, %c0_i32_1 : i32, i32, i32
  }
  func.func @transform_6(%arg0: i32) -> (i32, i32, i32) {
    %c0_i32 = arith.constant 0 : i32
    %c0_i32_0 = arith.constant 0 : i32
    %c0_i32_1 = arith.constant 0 : i32
    %c0_i32_2 = arith.constant 0 : i32
    return %c0_i32, %c0_i32_0, %c0_i32_1 : i32, i32, i32
  }
  func.func @transform_7(%arg0: i32) -> (i32, i32, i32) {
    %c0_i32 = arith.constant 0 : i32
    %c0_i32_0 = arith.constant 0 : i32
    %c0_i32_1 = arith.constant 0 : i32
    return %arg0, %c0_i32, %c0_i32_0 : i32, i32, i32
  }
  func.func @transform_8(%arg0: i32) -> (i32, i32, i32) {
    %c0_i32 = arith.constant 0 : i32
    %c0_i32_0 = arith.constant 0 : i32
    %c0_i32_1 = arith.constant 0 : i32
    return %arg0, %c0_i32, %c0_i32_0 : i32, i32, i32
  }
}

</mosaic_0001>

<llo_original>
// kernel: tile.33
$region0: #{tile.33}
  #allocation0 [shape = 's32[1]{0}', space=sflag, size = 0x4, scoped, tag = 'scoped memory for tile.33']
  %s0 = inlined_call_operand.vmem [shape: f32[8], index: 0, kind: input, shape index: {}]
  %s1 = inlined_call_operand.vmem [shape: f32[16,8], index: 1, kind: output, shape index: {}]
  // Predicated region
  $region2: #{tile.33} parent=0 // pred_check
    _
  $region3: #{tile.33} parent=0 // pred_check_branch
    %3 = sbr.rel (0) target = $region5
  $region4: #{tile.33} parent=0 // pred_region
    _
  $region5: #{tile.33} parent=0 // pred_fallthru
    _
  %v4 = vld [vmem:[%s0] ss:$0 sm:$0xff]
  %5 = vst [vmem:[%s1] sm:$0xff] %v4
  %s6 = scalar_lea.vmem %s1, 8
  %7 = vst [vmem:[%s6] sm:$0xff] %v4

// kernel: tile.42
$region0: #{tile.42}
  %s0 = inlined_call_operand.vmem [shape: f32[16,8], index: 0, kind: input, shape index: {}]
  %s1 = inlined_call_operand.vmem [shape: f32[1,128], index: 1, kind: output, shape index: {}]
  $region1: #{tile.42} parent=0
    #allocation0 [shape = 'u8[4096]{0}', space=vmem, size = 0x1000, scoped, tag = 'scoped mem for output reshape']
    %v2 = vld [vmem:[%s0] sm:$0x1]
    %vm3 = vcmask 64512
    %4 = vst.msk [vmem:[#allocation0] sm:$0x1] %vm3, %v2
    %s5 = scalar_lea.vmem %s0, 15
    %v6 = vld [vmem:[%s5] sm:$0x1]
    %7 = vrot.lane.b32.xlu0 %v6, 120
    %v8 = vpop.permute.xlu0 %7
    %vm9 = vcmask 1048512
    %10 = vst.msk [vmem:[#allocation0] sm:$0x1] %vm9, %v8
    %s11 = scalar_lea.vmem %s0, 14
    %v12 = vld [vmem:[%s11] sm:$0x1]
    %13 = vrot.lane.b32.xlu0 %v12, 112
    %v14 = vpop.permute.xlu0 %13
    %vm15 = vcmask 982912
    %16 = vst.msk [vmem:[#allocation0] sm:$0x1] %vm15, %v14
    %s17 = scalar_lea.vmem %s0, 13
    %v18 = vld [vmem:[%s17] sm:$0x1]
    %19 = vrot.lane.b32.xlu0 %v18, 104
    %v20 = vpop.permute.xlu0 %19
    %vm21 = vcmask 917312
    %22 = vst.msk [vmem:[#allocation0] sm:$0x1] %vm21, %v20
    %s23 = scalar_lea.vmem %s0, 12
    %v24 = vld [vmem:[%s23] sm:$0x1]
    %25 = vrot.lane.b32.xlu0 %v24, 96
    %v26 = vpop.permute.xlu0 %25
    %vm27 = vcmask 851712
    %28 = vst.msk [vmem:[#allocation0] sm:$0x1] %vm27, %v26
    %s29 = scalar_lea.vmem %s0, 11
    %v30 = vld [vmem:[%s29] sm:$0x1]
    %31 = vrot.lane.b32.xlu0 %v30, 88
    %v32 = vpop.permute.xlu0 %31
    %vm33 = vcmask 786112
    %34 = vst.msk [vmem:[#allocation0] sm:$0x1] %vm33, %v32
    %s35 = scalar_lea.vmem %s0, 10
    %v36 = vld [vmem:[%s35] sm:$0x1]
    %37 = vrot.lane.b32.xlu0 %v36, 80
    %v38 = vpop.permute.xlu0 %37
    %vm39 = vcmask 720512
    %40 = vst.msk [vmem:[#allocation0] sm:$0x1] %vm39, %v38
    %s41 = scalar_lea.vmem %s0, 9
    %v42 = vld [vmem:[%s41] sm:$0x1]
    %43 = vrot.lane.b32.xlu0 %v42, 72
    %v44 = vpop.permute.xlu0 %43
    %vm45 = vcmask 654912
    %46 = vst.msk [vmem:[#allocation0] sm:$0x1] %vm45, %v44
    %s47 = scalar_lea.vmem %s0, 8
    %v48 = vld [vmem:[%s47] sm:$0x1]
    %49 = vrot.lane.b32.xlu0 %v48, 64
    %v50 = vpop.permute.xlu0 %49
    %vm51 = vcmask 589312
    %52 = vst.msk [vmem:[#allocation0] sm:$0x1] %vm51, %v50
    %s53 = scalar_lea.vmem %s0, 7
    %v54 = vld [vmem:[%s53] sm:$0x1]
    %55 = vrot.lane.b32.xlu0 %v54, 56
    %v56 = vpop.permute.xlu0 %55
    %vm57 = vcmask 523712
    %58 = vst.msk [vmem:[#allocation0] sm:$0x1] %vm57, %v56
    %s59 = scalar_lea.vmem %s0, 6
    %v60 = vld [vmem:[%s59] sm:$0x1]
    %61 = vrot.lane.b32.xlu0 %v60, 48
    %v62 = vpop.permute.xlu0 %61
    %vm63 = vcmask 458112
    %64 = vst.msk [vmem:[#allocation0] sm:$0x1] %vm63, %v62
    %s65 = scalar_lea.vmem %s0, 5
    %v66 = vld [vmem:[%s65] sm:$0x1]
    %67 = vrot.lane.b32.xlu0 %v66, 40
    %v68 = vpop.permute.xlu0 %67
    %vm69 = vcmask 392512
    %70 = vst.msk [vmem:[#allocation0] sm:$0x1] %vm69, %v68
    %s71 = scalar_lea.vmem %s0, 4
    %v72 = vld [vmem:[%s71] sm:$0x1]
    %73 = vrot.lane.b32.xlu0 %v72, 32
    %v74 = vpop.permute.xlu0 %73
    %vm75 = vcmask 326912
    %76 = vst.msk [vmem:[#allocation0] sm:$0x1] %vm75, %v74
    %s77 = scalar_lea.vmem %s0, 3
    %v78 = vld [vmem:[%s77] sm:$0x1]
    %79 = vrot.lane.b32.xlu0 %v78, 24
    %v80 = vpop.permute.xlu0 %79
    %vm81 = vcmask 261312
    %82 = vst.msk [vmem:[#allocation0] sm:$0x1] %vm81, %v80
    %s83 = scalar_lea.vmem %s0, 2
    %v84 = vld [vmem:[%s83] sm:$0x1]
    %85 = vrot.lane.b32.xlu0 %v84, 16
    %v86 = vpop.permute.xlu0 %85
    %vm87 = vcmask 195712
    %88 = vst.msk [vmem:[#allocation0] sm:$0x1] %vm87, %v86
    %s89 = scalar_lea.vmem %s0, 1
    %v90 = vld [vmem:[%s89] sm:$0x1]
    %91 = vrot.lane.b32.xlu0 %v90, 8
    %v92 = vpop.permute.xlu0 %91
    %vm93 = vcmask 130112
    %94 = vst.msk [vmem:[#allocation0] sm:$0x1] %vm93, %v92
    %s96 = ssub.s32 2, 1
    %v97 = vld [vmem:[#allocation0] sm:%s96]
    %s99 = ssub.s32 2, 1
    %100 = vst [vmem:[%s1] sm:%s99] %v97

// kernel: stack_encoder_norm.1
$region0: #{stack_encoder_norm.1}
  #allocation0 [shape = 'u32[]', space=smem, size = 0x4, offset = 0x4, fixed_abs, tag = 'smem constant byte address 0x4 - core index']
  #allocation1 [shape = 'u32[72,128]{1,0:T(1,128)}', space=vmem, size = 0x9000, scoped, tag = 'internal scratch']
  %s0 = inlined_call_operand.vmem [shape: f32[2,16,64], index: 0, kind: input, shape index: {}]
  %s1 = inlined_call_operand.vmem [shape: bf16[192,128], index: 1, kind: input, shape index: {}]
  %s2 = inlined_call_operand.vmem [shape: bf16[384,128], index: 2, kind: input, shape index: {}]
  %s3 = inlined_call_operand.vmem [shape: f32[3,128], index: 3, kind: input, shape index: {}]
  %s4 = inlined_call_operand.vmem [shape: f32[3,128], index: 4, kind: input, shape index: {}]
  %s5 = inlined_call_operand.vmem [shape: f32[4,4,16], index: 5, kind: input, shape index: {}]
  %s6 = inlined_call_operand.vmem [shape: f32[4,128,128], index: 6, kind: input, shape index: {}]
  %s7 = inlined_call_operand.vmem [shape: f32[2,16,128], index: 7, kind: output, shape index: {0}]
  %s8 = inlined_call_operand.vmem [shape: f32[2,4,128], index: 8, kind: output, shape index: {1}]
  %9 = xla_tuple %s7, %s8
  %s10 = sld [smem:[#allocation0]]
  $region69: #{stack_encoder_norm.1} parent=0
    _
  %s12 = ssub.s32 1, %s10
  %s13 = scalar_select 0, %s12, %s10
  loop: start=0, step=1, limit=4
  $region2: #{stack_encoder_norm.1} parent=0 // loop_pre_header
    _
  $region3: #{stack_encoder_norm.1} parent=0 // loop_header
    %s15 = sphi 0, %s19
    %p16 = scmp.ge.s32.totalorder %s15, 4
    %s25 = sphi 0, %s27
    %s28 = sphi 0, %s25
    %s29 = sphi 0, %s28
    %s45 = sphi 0, %s29
    %s49 = sphi 0, %s49
    %s51 = sphi 0, %s49
    %s52 = sphi 0, %s51
    %s66 = sphi 0, %s52
    %s70 = sphi 0, %s70
    %s72 = sphi 0, %s70
    %s73 = sphi 0, %s72
    %s87 = sphi 0, %s73
    %s91 = sphi 0, %s91
    %s93 = sphi 0, %s91
    %s94 = sphi 0, %s93
    %s108 = sphi 0, %s94
    %s112 = sphi 0, %s112
    %s114 = sphi 0, %s112
    %s115 = sphi 0, %s114
    %s129 = sphi 0, %s115
    %s133 = sphi 0, %s133
    %s135 = sphi 0, %s133
    %s136 = sphi 0, %s135
    %s150 = sphi 0, %s136
    %s154 = sphi 0, %s154
    %s156 = sphi 0, %s154
    %s157 = sphi 0, %s156
    %s171 = sphi 0, %s157
    %s177 = sphi 0, %s179
    %s180 = sphi 0, %s177
    %s181 = sphi 0, %s180
    %s197 = sphi 0, %s181
    %s203 = sphi 0, %s205
    %s206 = sphi 0, %s203
    %s207 = sphi 0, %s206
    %s223 = sphi 0, %s207
  $region4: #{stack_encoder_norm.1} parent=0 // loop_header_branch
    %18 = sbr.rel (%p16) target = $region8
  $region5: #{stack_encoder_norm.1} parent=0 // loop_body
    %s20 = ssub.s32 %s15, 1
    %s21 = ssub.s32 %s15, 2
    %s22 = sadd.s32 %s15, 1
    %s23 = ssub.s32 %s15, %s22
    %p24 = scmp.eq.s32.totalorder %s23, 0
    %s26 = sadd.s32 %s25, 1
    %s27 = scalar_select %p24, %s25, %s26
    %p30 = pneg %p24
    %p31 = scmp.eq.s32.totalorder %s15, 1
    %p32 = por %p30, %p31
    %p33 = scmp.ne.s32.totalorder %s25, %s28
    %p34 = scmp.eq.s32.totalorder %s15, 0
    %p35 = por %p33, %p34
    %p36 = scmp.ne.s32.totalorder %s25, %s28
    %p37 = scmp.eq.s32.totalorder %s20, 1
    %p38 = por %p36, %p37
    %p39 = scmp.ne.s32.totalorder %s28, %s29
    %p40 = scmp.eq.s32.totalorder %s20, 0
    %p41 = por %p39, %p40
    %p42 = scmp.ne.s32.totalorder %s28, %s29
    %p43 = scmp.eq.s32.totalorder %s21, 1
    %p44 = por %p42, %p43
    %p46 = scmp.ne.s32.totalorder %s29, %s45
    %p47 = scmp.eq.s32.totalorder %s21, 0
    %p48 = por %p46, %p47
    %s50 = sadd.s32 %s49, 1
    %p53 = scmp.eq.s32.totalorder %s15, 1
    %p54 = scmp.ne.s32.totalorder %s49, %s51
    %p55 = scmp.eq.s32.totalorder %s15, 0
    %p56 = por %p54, %p55
    %p57 = scmp.ne.s32.totalorder %s49, %s51
    %p58 = scmp.eq.s32.totalorder %s20, 1
    %p59 = por %p57, %p58
    %p60 = scmp.ne.s32.totalorder %s51, %s52
    %p61 = scmp.eq.s32.totalorder %s20, 0
    %p62 = por %p60, %p61
    %p63 = scmp.ne.s32.totalorder %s51, %s52
    %p64 = scmp.eq.s32.totalorder %s21, 1
    %p65 = por %p63, %p64
    %p67 = scmp.ne.s32.totalorder %s52, %s66
    %p68 = scmp.eq.s32.totalorder %s21, 0
    %p69 = por %p67, %p68
    %s71 = sadd.s32 %s70, 1
    %p74 = scmp.eq.s32.totalorder %s15, 1
    %p75 = scmp.ne.s32.totalorder %s70, %s72
    %p76 = scmp.eq.s32.totalorder %s15, 0
    %p77 = por %p75, %p76
    %p78 = scmp.ne.s32.totalorder %s70, %s72
    %p79 = scmp.eq.s32.totalorder %s20, 1
    %p80 = por %p78, %p79
    %p81 = scmp.ne.s32.totalorder %s72, %s73
    %p82 = scmp.eq.s32.totalorder %s20, 0
    %p83 = por %p81, %p82
    %p84 = scmp.ne.s32.totalorder %s72, %s73
    %p85 = scmp.eq.s32.totalorder %s21, 1
    %p86 = por %p84, %p85
    %p88 = scmp.ne.s32.totalorder %s73, %s87
    %p89 = scmp.eq.s32.totalorder %s21, 0
    %p90 = por %p88, %p89
    %s92 = sadd.s32 %s91, 1
    %p95 = scmp.eq.s32.totalorder %s15, 1
    %p96 = scmp.ne.s32.totalorder %s91, %s93
    %p97 = scmp.eq.s32.totalorder %s15, 0
    %p98 = por %p96, %p97
    %p99 = scmp.ne.s32.totalorder %s91, %s93
    %p100 = scmp.eq.s32.totalorder %s20, 1
    %p101 = por %p99, %p100
    %p102 = scmp.ne.s32.totalorder %s93, %s94
    %p103 = scmp.eq.s32.totalorder %s20, 0
    %p104 = por %p102, %p103
    %p105 = scmp.ne.s32.totalorder %s93, %s94
    %p106 = scmp.eq.s32.totalorder %s21, 1
    %p107 = por %p105, %p106
    %p109 = scmp.ne.s32.totalorder %s94, %s108
    %p110 = scmp.eq.s32.totalorder %s21, 0
    %p111 = por %p109, %p110
    %s113 = sadd.s32 %s112, 1
    %p116 = scmp.eq.s32.totalorder %s15, 1
    %p117 = scmp.ne.s32.totalorder %s112, %s114
    %p118 = scmp.eq.s32.totalorder %s15, 0
    %p119 = por %p117, %p118
    %p120 = scmp.ne.s32.totalorder %s112, %s114
    %p121 = scmp.eq.s32.totalorder %s20, 1
    %p122 = por %p120, %p121
    %p123 = scmp.ne.s32.totalorder %s114, %s115
    %p124 = scmp.eq.s32.totalorder %s20, 0
    %p125 = por %p123, %p124
    %p126 = scmp.ne.s32.totalorder %s114, %s115
    %p127 = scmp.eq.s32.totalorder %s21, 1
    %p128 = por %p126, %p127
    %p130 = scmp.ne.s32.totalorder %s115, %s129
    %p131 = scmp.eq.s32.totalorder %s21, 0
    %p132 = por %p130, %p131
    %s134 = sadd.s32 %s133, 1
    %p137 = scmp.eq.s32.totalorder %s15, 1
    %p138 = scmp.ne.s32.totalorder %s133, %s135
    %p139 = scmp.eq.s32.totalorder %s15, 0
    %p140 = por %p138, %p139
    %p141 = scmp.ne.s32.totalorder %s133, %s135
    %p142 = scmp.eq.s32.totalorder %s20, 1
    %p143 = por %p141, %p142
    %p144 = scmp.ne.s32.totalorder %s135, %s136
    %p145 = scmp.eq.s32.totalorder %s20, 0
    %p146 = por %p144, %p145
    %p147 = scmp.ne.s32.totalorder %s135, %s136
    %p148 = scmp.eq.s32.totalorder %s21, 1
    %p149 = por %p147, %p148
    %p151 = scmp.ne.s32.totalorder %s136, %s150
    %p152 = scmp.eq.s32.totalorder %s21, 0
    %p153 = por %p151, %p152
    %s155 = sadd.s32 %s154, 1
    %p158 = scmp.eq.s32.totalorder %s15, 1
    %p159 = scmp.ne.s32.totalorder %s154, %s156
    %p160 = scmp.eq.s32.totalorder %s15, 0
    %p161 = por %p159, %p160
    %p162 = scmp.ne.s32.totalorder %s154, %s156
    %p163 = scmp.eq.s32.totalorder %s20, 1
    %p164 = por %p162, %p163
    %p165 = scmp.ne.s32.totalorder %s156, %s157
    %p166 = scmp.eq.s32.totalorder %s20, 0
    %p167 = por %p165, %p166
    %p168 = scmp.ne.s32.totalorder %s156, %s157
    %p169 = scmp.eq.s32.totalorder %s21, 1
    %p170 = por %p168, %p169
    %p172 = scmp.ne.s32.totalorder %s157, %s171
    %p173 = scmp.eq.s32.totalorder %s21, 0
    %p174 = por %p172, %p173
    %s175 = ssub.s32 %s15, %s22
    %p176 = scmp.eq.s32.totalorder %s175, 0
    %s178 = sadd.s32 %s177, 1
    %s179 = scalar_select %p176, %s177, %s178
    %p182 = pneg %p176
    %p183 = scmp.eq.s32.totalorder %s15, 1
    %p184 = por %p182, %p183
    %p185 = scmp.ne.s32.totalorder %s177, %s180
    %p186 = scmp.eq.s32.totalorder %s15, 0
    %p187 = por %p185, %p186
    %p188 = scmp.ne.s32.totalorder %s177, %s180
    %p189 = scmp.eq.s32.totalorder %s20, 1
    %p190 = por %p188, %p189
    %p191 = scmp.ne.s32.totalorder %s180, %s181
    %p192 = scmp.eq.s32.totalorder %s20, 0
    %p193 = por %p191, %p192
    %p194 = scmp.ne.s32.totalorder %s180, %s181
    %p195 = scmp.eq.s32.totalorder %s21, 1
    %p196 = por %p194, %p195
    %p198 = scmp.ne.s32.totalorder %s181, %s197
    %p199 = scmp.eq.s32.totalorder %s21, 0
    %p200 = por %p198, %p199
    %s201 = ssub.s32 %s15, %s22
    %p202 = scmp.eq.s32.totalorder %s201, 0
    %s204 = sadd.s32 %s203, 1
    %s205 = scalar_select %p202, %s203, %s204
    %p208 = pneg %p202
    %p209 = scmp.eq.s32.totalorder %s15, 1
    %p210 = por %p208, %p209
    %p211 = scmp.ne.s32.totalorder %s203, %s206
    %p212 = scmp.eq.s32.totalorder %s15, 0
    %p213 = por %p211, %p212
    %p214 = scmp.ne.s32.totalorder %s203, %s206
    %p215 = scmp.eq.s32.totalorder %s20, 1
    %p216 = por %p214, %p215
    %p217 = scmp.ne.s32.totalorder %s206, %s207
    %p218 = scmp.eq.s32.totalorder %s20, 0
    %p219 = por %p217, %p218
    %p220 = scmp.ne.s32.totalorder %s206, %s207
    %p221 = scmp.eq.s32.totalorder %s21, 1
    %p222 = por %p220, %p221
    %p224 = scmp.ne.s32.totalorder %s207, %s223
    %p225 = scmp.eq.s32.totalorder %s21, 0
    %p226 = por %p224, %p225
    %p227 = scmp.le.s32.totalorder 1, %s15
    %p228 = scmp.lt.s32.totalorder %s15, 3
    %p229 = pnand %p227, %p228
    %p230 = pneg %p229
    // Predicated region
    $region9: #{stack_encoder_norm.1} parent=5 // pred_check
      _
    $region10: #{stack_encoder_norm.1} parent=5 // pred_check_branch
      %232 = sbr.rel (%p229) target = $region12
    $region11: #{stack_encoder_norm.1} parent=5 // pred_region
      %s233 = ssub.s32 %s15, 1
      // Predicated region
      $region13: #{stack_encoder_norm.1} parent=11 // pred_check
        %p234 = pneg %p62
      $region14: #{stack_encoder_norm.1} parent=11 // pred_check_branch
        %236 = sbr.rel (%p234) target = $region16
      $region15: #{stack_encoder_norm.1} parent=11 // pred_region
        _
      $region16: #{stack_encoder_norm.1} parent=11 // pred_fallthru
        _
      // Predicated region
      $region17: #{stack_encoder_norm.1} parent=11 // pred_check
        %p237 = pneg %p83
      $region18: #{stack_encoder_norm.1} parent=11 // pred_check_branch
        %239 = sbr.rel (%p237) target = $region20
      $region19: #{stack_encoder_norm.1} parent=11 // pred_region
        _
      $region20: #{stack_encoder_norm.1} parent=11 // pred_fallthru
        _
      // Predicated region
      $region21: #{stack_encoder_norm.1} parent=11 // pred_check
        %p240 = pneg %p104
      $region22: #{stack_encoder_norm.1} parent=11 // pred_check_branch
        %242 = sbr.rel (%p240) target = $region24
      $region23: #{stack_encoder_norm.1} parent=11 // pred_region
        _
      $region24: #{stack_encoder_norm.1} parent=11 // pred_fallthru
        _
      // Predicated region
      $region25: #{stack_encoder_norm.1} parent=11 // pred_check
        %p243 = pneg %p125
      $region26: #{stack_encoder_norm.1} parent=11 // pred_check_branch
        %245 = sbr.rel (%p243) target = $region28
      $region27: #{stack_encoder_norm.1} parent=11 // pred_region
        _
      $region28: #{stack_encoder_norm.1} parent=11 // pred_fallthru
        _
      // Predicated region
      $region29: #{stack_encoder_norm.1} parent=11 // pred_check
        %p246 = pneg %p146
      $region30: #{stack_encoder_norm.1} parent=11 // pred_check_branch
        %248 = sbr.rel (%p246) target = $region32
      $region31: #{stack_encoder_norm.1} parent=11 // pred_region
        _
      $region32: #{stack_encoder_norm.1} parent=11 // pred_fallthru
        _
      // Predicated region
      $region33: #{stack_encoder_norm.1} parent=11 // pred_check
        %p249 = pneg %p167
      $region34: #{stack_encoder_norm.1} parent=11 // pred_check_branch
        %251 = sbr.rel (%p249) target = $region36
      $region35: #{stack_encoder_norm.1} parent=11 // pred_region
        _
      $region36: #{stack_encoder_norm.1} parent=11 // pred_fallthru
        _
    $region12: #{stack_encoder_norm.1} parent=5 // pred_fallthru
      _
    %p252 = scmp.lt.s32.totalorder %s15, 2
    // Predicated region
    $region37: #{stack_encoder_norm.1} parent=5 // pred_check
      %p253 = pneg %p252
    $region38: #{stack_encoder_norm.1} parent=5 // pred_check_branch
      %255 = sbr.rel (%p253) target = $region40
    $region39: #{stack_encoder_norm.1} parent=5 // pred_region
      // Predicated region
      $region41: #{stack_encoder_norm.1} parent=39 // pred_check
        %p256 = pneg %p35
      $region42: #{stack_encoder_norm.1} parent=39 // pred_check_branch
        %258 = sbr.rel (%p256) target = $region44
      $region43: #{stack_encoder_norm.1} parent=39 // pred_region
        %p259 = scmp.lt.s32.totalorder %s15, 1
        %s260 = scalar_select %p259, %s15, 1
        %s261 = smul.addr %s260, 2
        %s262 = smul.addr %s261, 8
        %s263 = scalar_lea.vmem %s0, %s262
      $region44: #{stack_encoder_norm.1} parent=39 // pred_fallthru
        _
    $region40: #{stack_encoder_norm.1} parent=5 // pred_fallthru
      _
    %p264 = scmp.le.s32.totalorder 1, %s15
    %p265 = scmp.lt.s32.totalorder %s15, 3
    %p266 = pnand %p264, %p265
    %p267 = pneg %p266
    // Predicated region
    $region45: #{stack_encoder_norm.1} parent=5 // pred_check
      _
    $region46: #{stack_encoder_norm.1} parent=5 // pred_check_branch
      %269 = sbr.rel (%p266) target = $region48
    $region47: #{stack_encoder_norm.1} parent=5 // pred_region
      %s270 = ssub.s32 %s15, 1
      %p271 = scmp.lt.s32.totalorder %s20, 1
      %s272 = scalar_select %p271, %s20, 1
      %s273 = smul.addr %s272, 2
      %s274 = smul.addr %s273, 8
      %s275 = scalar_lea.vmem %s0, %s274
      %p276 = pneg %p41
      %p277 = pneg %p38
      %p278 = pneg %p62
      %p279 = pneg %p59
      %p280 = pneg %p83
      %p281 = pneg %p80
      %p282 = pneg %p104
      %p283 = pneg %p101
      %p284 = pneg %p125
      %p285 = pneg %p122
      %p286 = pneg %p146
      %p287 = pneg %p143
      %p288 = pneg %p167
      %p289 = pneg %p164
      %p290 = pneg %p193
      %p291 = pneg %p190
      %p292 = scmp.lt.s32.totalorder %s20, 1
      %s293 = scalar_select %p292, %s20, 1
      %s294 = smul.addr %s293, 2
      %s295 = smul.addr %s294, 8
      %s296 = scalar_lea.vmem %s7, %s295
      %p297 = pneg %p219
      %p298 = pneg %p216
      %p299 = scmp.lt.s32.totalorder %s20, 1
      %s300 = scalar_select %p299, %s20, 1
      %s301 = smul.addr %s300, 4
      %s302 = scalar_lea.vmem %s8, %s301
      %p303 = scmp.lt.s32.totalorder %s20, 1
      %s304 = scalar_select %p303, %s20, 1
      %s305 = smul.addr %s304, 2
      %s306 = smul.addr %s305, 8
      %s307 = scalar_lea.vmem %s0, %s306
      %p308 = scmp.lt.s32.totalorder %s20, 1
      %s309 = scalar_select %p308, %s20, 1
      %s310 = smul.addr %s309, 2
      %s311 = smul.addr %s310, 8
      %s312 = scalar_lea.vmem %s7, %s311
      %p313 = scmp.lt.s32.totalorder %s20, 1
      %s314 = scalar_select %p313, %s20, 1
      %s315 = smul.addr %s314, 4
      %s316 = scalar_lea.vmem %s8, %s315
      %v318 = vld [vmem:[%s307] sm:$0xff]
      %v319 = vld [vmem:[%s307 + $0x8] sm:$0xff]
      %v320 = vlaneseq
      %v321 = vshrl.u32 %v320, 7
      %v322 = vadd.s32 %v321, 8
      %v323 = vrot.slane %v318, 7
      %v324 = vrot.slane %v319, 7
      %vm325 = vcmp.lt.s32.totalorder %v321, 1
      %v326 = vsel %vm325, %v323, %v324
      %v327 = vsel %vm325, %v324, %v323
      %vm328 = vcmp.ge.s32.totalorder %v321, 1
      %vm329 = vcmp.ge.s32.totalorder %v322, 1
      %v330 = vsel %vm328, %v327, 0.0
      %v331 = vsel %vm329, %v326, 0.0
      %v332 = vrot.slane %v318, 1
      %v333 = vrot.slane %v319, 1
      %vm334 = vcmp.lt.s32.totalorder %v321, 7
      %v335 = vsel %vm334, %v332, %v333
      %v336 = vsel %vm334, %v333, %v332
      %vm337 = vcmp.lt.s32.totalorder %v321, 15
      %vm338 = vcmp.lt.s32.totalorder %v322, 15
      %v339 = vsel %vm337, %v335, 0.0
      %v340 = vsel %vm338, %v336, 0.0
      %343 = vrot.lane.b32.xlu0 %v318, 64
      %v344 = vpop.permute.xlu0 %343
      %345 = vrot.lane.b32.xlu0 %v319, 64
      %v346 = vpop.permute.xlu0 %345
      %vm349 = vcmask 523264
      %v350 = vsel %vm349, %v330, %v344
      %v351 = vsel %vm349, %v331, %v346
      %v352 = vpack.c.bf16 %v351, %v350
      %v353 = vpack.c.bf16 %v340, %v339
      %v354 = vld [vmem:[%s1] sm:$0xf]
      %v355 = vld [vmem:[%s1 + $0x4] sm:$0xf]
      %v356 = vld [vmem:[%s1 + $0x8] sm:$0xf]
      %v357 = vld [vmem:[%s1 + $0xc] sm:$0xf]
      %v358 = vld [vmem:[%s1 + $0x10] sm:$0xf]
      %v359 = vld [vmem:[%s1 + $0x14] sm:$0xf]
      %v360 = vld [vmem:[%s1 + $0x18] sm:$0xf]
      %v361 = vld [vmem:[%s1 + $0x1c] sm:$0xf]
      %v362 = vld [vmem:[%s1 + $0x20] sm:$0xf]
      %v363 = vld [vmem:[%s1 + $0x24] sm:$0xf]
      %v364 = vld [vmem:[%s1 + $0x28] sm:$0xf]
      %v365 = vld [vmem:[%s1 + $0x2c] sm:$0xf]
      %v366 = vld [vmem:[%s1 + $0x30] sm:$0xf]
      %v367 = vld [vmem:[%s1 + $0x34] sm:$0xf]
      %v368 = vld [vmem:[%s1 + $0x38] sm:$0xf]
      %v369 = vld [vmem:[%s1 + $0x3c] sm:$0xf]
      %v370 = vld [vmem:[%s1 + $0x40] sm:$0xf]
      %v371 = vld [vmem:[%s1 + $0x44] sm:$0xf]
      %v372 = vld [vmem:[%s1 + $0x48] sm:$0xf]
      %v373 = vld [vmem:[%s1 + $0x4c] sm:$0xf]
      %v374 = vld [vmem:[%s1 + $0x50] sm:$0xf]
      %v375 = vld [vmem:[%s1 + $0x54] sm:$0xf]
      %v376 = vld [vmem:[%s1 + $0x58] sm:$0xf]
      %v377 = vld [vmem:[%s1 + $0x5c] sm:$0xf]
      %v378 = vld [vmem:[%s3] sm:$0x7]
      %v379 = vperm.slane %v378, 0
      %v404 = vunpack.c.l.b16 %v354
      %v405 = vunpack.c.l.b16 %v355
      %v406 = vunpack.c.l.b16 %v356
      %v407 = vunpack.c.l.b16 %v357
      %v408 = vunpack.c.l.b16 %v358
      %v409 = vunpack.c.l.b16 %v359
      %v410 = vunpack.c.l.b16 %v360
      %v411 = vunpack.c.l.b16 %v361
      %v412 = vunpack.c.l.b16 %v362
      %v413 = vunpack.c.l.b16 %v363
      %v414 = vunpack.c.l.b16 %v364
      %v415 = vunpack.c.l.b16 %v365
      %v416 = vunpack.c.l.b16 %v366
      %v417 = vunpack.c.l.b16 %v367
      %v418 = vunpack.c.l.b16 %v368
      %v419 = vunpack.c.l.b16 %v369
      %v420 = vunpack.c.l.b16 %v370
      %v421 = vunpack.c.l.b16 %v371
      %v422 = vunpack.c.l.b16 %v372
      %v423 = vunpack.c.l.b16 %v373
      %v424 = vunpack.c.l.b16 %v374
      %v425 = vunpack.c.l.b16 %v375
      %v426 = vunpack.c.l.b16 %v376
      %v427 = vunpack.c.l.b16 %v377
      %v428 = vpack.c.b16 %v405, %v404
      %v429 = vpack.c.b16 %v407, %v406
      %v430 = vpack.c.b16 %v409, %v408
      %v431 = vpack.c.b16 %v411, %v410
      %v432 = vpack.c.b16 %v413, %v412
      %v433 = vpack.c.b16 %v415, %v414
      %v434 = vpack.c.b16 %v417, %v416
      %v435 = vpack.c.b16 %v419, %v418
      %v436 = vpack.c.b16 %v421, %v420
      %v437 = vpack.c.b16 %v423, %v422
      %v438 = vpack.c.b16 %v425, %v424
      %v439 = vpack.c.b16 %v427, %v426
      %v453 = vsel %vm349, %v353, 0
      %455 = vmatpush.bf16.msra.mxu0 %v435
      %456 = vmatpush.bf16.msra.mxu0 %v434
      %457 = vmatpush.bf16.msra.mxu0 %v433
      %458 = vmatpush.bf16.msra.mxu0 %v432
      %459 = vmatpush.bf16.msra.mxu0 %v431
      %460 = vmatpush.bf16.msra.mxu0 %v430
      %461 = vmatpush.bf16.msra.mxu0 %v429
      %462 = vmatpush.bf16.msra.mxu0 %v428
      %463 = vmatmul.bf16.gmra.mxu0 %v352
      %v464 = vpop.f32.mrf.mxu0
      %v465 = vadd.f32 %v379, %v464
      %v466 = vpop.f32.mrf.mxu0
      %v467 = vadd.f32 %v379, %v466
      %468 = vdwg.mxu0
      %469 = vmatpush.bf16.msra.mxu0 0
      %470 = vmatpush.bf16.msra.mxu0 0
      %471 = vmatpush.bf16.msra.mxu0 0
      %472 = vmatpush.bf16.msra.mxu0 0
      %473 = vmatpush.bf16.msra.mxu0 %v439
      %474 = vmatpush.bf16.msra.mxu0 %v438
      %475 = vmatpush.bf16.msra.mxu0 %v437
      %476 = vmatpush.bf16.msra.mxu0 %v436
      %477 = vmatmul.bf16.gmra.mxu0 %v453
      %v478 = vpop.f32.mrf.mxu0
      %v479 = vadd.f32 %v465, %v478
      %v480 = vpop.f32.mrf.mxu0
      %v481 = vadd.f32 %v467, %v480
      %482 = vdwg.mxu0
      %v483 = vadd.f32 %v479, %v481
      %484 = vadd.xlane.f32.xlu0 %v483
      %v485 = vpop.xlane.xlu0 %484
      %v486 = vrot.slane %v485, 4
      %v487 = vadd.f32 %v485, %v486
      %v488 = vrot.slane %v487, 2
      %v489 = vadd.f32 %v487, %v488
      %v490 = vrot.slane %v489, 1
      %v491 = vadd.f32 %v489, %v490
      %s492 = vtos %v491
      %v493 = vrcp.pop 2048.0
      %v494 = vmul.f32 2048.0, %v493
      %v495 = vsub.f32 1.0, %v494
      %v496 = vmul.f32 %v493, %v495
      %v497 = vadd.f32 %v493, %v496
      %vm498 = vweird.f32 %v493
      %v499 = vsel %vm498, %v493, %v497
      %s500 = vtos %v499
      %s501 = smul.f32 %s492, %s500
      %v502 = vstv %s501
      %v503 = vsub.f32 %v479, %v502
      %v504 = vsub.f32 %v481, %v502
      %v505 = vmul.f32 %v503, %v503
      %v506 = vmul.f32 %v504, %v504
      %v507 = vadd.f32 %v505, %v506
      %508 = vadd.xlane.f32.xlu0 %v507
      %v509 = vpop.xlane.xlu0 %508
      %v510 = vrot.slane %v509, 4
      %v511 = vadd.f32 %v509, %v510
      %v512 = vrot.slane %v511, 2
      %v513 = vadd.f32 %v511, %v512
      %v514 = vrot.slane %v513, 1
      %v515 = vadd.f32 %v513, %v514
      %s516 = vtos %v515
      %v517 = vrcp.pop 2048.0
      %v518 = vmul.f32 2048.0, %v517
      %v519 = vsub.f32 1.0, %v518
      %v520 = vmul.f32 %v517, %v519
      %v521 = vadd.f32 %v517, %v520
      %vm522 = vweird.f32 %v517
      %v523 = vsel %vm522, %v517, %v521
      %s524 = vtos %v523
      %s525 = smul.f32 %s516, %s524
      %s526 = sadd.f32 %s525, 1e-05
      %v527 = vstv %s526
      %v528 = vrsqrt.pop %v527
      %v529 = vmul.f32 %v528, %v527
      %v530 = vmul.f32 %v529, %v528
      %v531 = vmul.f32 0.5, %v530
      %v532 = vsub.f32 1.5, %v531
      %v533 = vmul.f32 %v528, %v532
      %vm534 = vweird.f32 %v527
      %vm535 = vweird.f32 %v528
      %vm536 = vmor %vm534, %vm535
      %v537 = vsel %vm536, %v528, %v533
      %s538 = vtos %v537
      %v539 = vstv %s538
      %v540 = vmul.f32 %v503, %v539
      %v541 = vmul.f32 %v504, %v539
      %v542 = vperm.slane %v378, 1
      %v543 = vmul.f32 %v540, %v542
      %v544 = vmul.f32 %v541, %v542
      %v545 = vperm.slane %v378, 2
      %v546 = vadd.f32 %v543, %v545
      %v547 = vadd.f32 %v544, %v545
      %v548 = vmax.f32 %v546, 0.0
      %v549 = vmax.f32 %v547, 0.0
      %v550 = vrot.slane %v548, 7
      %v551 = vrot.slane %v549, 7
      %v552 = vsel %vm325, %v550, %v551
      %v553 = vsel %vm325, %v551, %v550
      %v554 = vsel %vm328, %v553, 0.0
      %v555 = vsel %vm329, %v552, 0.0
      %v556 = vrot.slane %v548, 1
      %v557 = vrot.slane %v549, 1
      %v558 = vsel %vm334, %v556, %v557
      %v559 = vsel %vm334, %v557, %v556
      %v560 = vsel %vm337, %v558, 0.0
      %v561 = vsel %vm338, %v559, 0.0
      %v562 = vpack.c.bf16 %v555, %v554
      %v563 = vpack.c.bf16 %v549, %v548
      %v564 = vpack.c.bf16 %v561, %v560
      %v565 = vld [vmem:[%s2] sm:$0xf]
      %v566 = vld [vmem:[%s2 + $0x4] sm:$0xf]
      %v567 = vld [vmem:[%s2 + $0x8] sm:$0xf]
      %v568 = vld [vmem:[%s2 + $0xc] sm:$0xf]
      %v569 = vld [vmem:[%s2 + $0x10] sm:$0xf]
      %v570 = vld [vmem:[%s2 + $0x14] sm:$0xf]
      %v571 = vld [vmem:[%s2 + $0x18] sm:$0xf]
      %v572 = vld [vmem:[%s2 + $0x1c] sm:$0xf]
      %v573 = vld [vmem:[%s2 + $0x20] sm:$0xf]
      %v574 = vld [vmem:[%s2 + $0x24] sm:$0xf]
      %v575 = vld [vmem:[%s2 + $0x28] sm:$0xf]
      %v576 = vld [vmem:[%s2 + $0x2c] sm:$0xf]
      %v577 = vld [vmem:[%s2 + $0x30] sm:$0xf]
      %v578 = vld [vmem:[%s2 + $0x34] sm:$0xf]
      %v579 = vld [vmem:[%s2 + $0x38] sm:$0xf]
      %v580 = vld [vmem:[%s2 + $0x3c] sm:$0xf]
      %v581 = vld [vmem:[%s2 + $0x40] sm:$0xf]
      %v582 = vld [vmem:[%s2 + $0x44] sm:$0xf]
      %v583 = vld [vmem:[%s2 + $0x48] sm:$0xf]
      %v584 = vld [vmem:[%s2 + $0x4c] sm:$0xf]
      %v585 = vld [vmem:[%s2 + $0x50] sm:$0xf]
      %v586 = vld [vmem:[%s2 + $0x54] sm:$0xf]
      %v587 = vld [vmem:[%s2 + $0x58] sm:$0xf]
      %v588 = vld [vmem:[%s2 + $0x5c] sm:$0xf]
      %v589 = vld [vmem:[%s2 + $0x60] sm:$0xf]
      %v590 = vld [vmem:[%s2 + $0x64] sm:$0xf]
      %v591 = vld [vmem:[%s2 + $0x68] sm:$0xf]
      %v592 = vld [vmem:[%s2 + $0x6c] sm:$0xf]
      %v593 = vld [vmem:[%s2 + $0x70] sm:$0xf]
      %v594 = vld [vmem:[%s2 + $0x74] sm:$0xf]
      %v595 = vld [vmem:[%s2 + $0x78] sm:$0xf]
      %v596 = vld [vmem:[%s2 + $0x7c] sm:$0xf]
      %v597 = vld [vmem:[%s2 + $0x80] sm:$0xf]
      %v598 = vld [vmem:[%s2 + $0x84] sm:$0xf]
      %v599 = vld [vmem:[%s2 + $0x88] sm:$0xf]
      %v600 = vld [vmem:[%s2 + $0x8c] sm:$0xf]
      %v601 = vld [vmem:[%s2 + $0x90] sm:$0xf]
      %v602 = vld [vmem:[%s2 + $0x94] sm:$0xf]
      %v603 = vld [vmem:[%s2 + $0x98] sm:$0xf]
      %v604 = vld [vmem:[%s2 + $0x9c] sm:$0xf]
      %v605 = vld [vmem:[%s2 + $0xa0] sm:$0xf]
      %v606 = vld [vmem:[%s2 + $0xa4] sm:$0xf]
      %v607 = vld [vmem:[%s2 + $0xa8] sm:$0xf]
      %v608 = vld [vmem:[%s2 + $0xac] sm:$0xf]
      %v609 = vld [vmem:[%s2 + $0xb0] sm:$0xf]
      %v610 = vld [vmem:[%s2 + $0xb4] sm:$0xf]
      %v611 = vld [vmem:[%s2 + $0xb8] sm:$0xf]
      %v612 = vld [vmem:[%s2 + $0xbc] sm:$0xf]
      %v613 = vld [vmem:[%s4] sm:$0x7]
      %v614 = vperm.slane %v613, 0
      %v663 = vunpack.c.l.b16 %v565
      %v664 = vunpack.c.l.b16 %v566
      %v665 = vunpack.c.l.b16 %v567
      %v666 = vunpack.c.l.b16 %v568
      %v667 = vunpack.c.l.b16 %v569
      %v668 = vunpack.c.l.b16 %v570
      %v669 = vunpack.c.l.b16 %v571
      %v670 = vunpack.c.l.b16 %v572
      %v671 = vunpack.c.l.b16 %v573
      %v672 = vunpack.c.l.b16 %v574
      %v673 = vunpack.c.l.b16 %v575
      %v674 = vunpack.c.l.b16 %v576
      %v675 = vunpack.c.l.b16 %v577
      %v676 = vunpack.c.l.b16 %v578
      %v677 = vunpack.c.l.b16 %v579
      %v678 = vunpack.c.l.b16 %v580
      %v679 = vunpack.c.l.b16 %v581
      %v680 = vunpack.c.l.b16 %v582
      %v681 = vunpack.c.l.b16 %v583
      %v682 = vunpack.c.l.b16 %v584
      %v683 = vunpack.c.l.b16 %v585
      %v684 = vunpack.c.l.b16 %v586
      %v685 = vunpack.c.l.b16 %v587
      %v686 = vunpack.c.l.b16 %v588
      %v687 = vunpack.c.l.b16 %v589
      %v688 = vunpack.c.l.b16 %v590
      %v689 = vunpack.c.l.b16 %v591
      %v690 = vunpack.c.l.b16 %v592
      %v691 = vunpack.c.l.b16 %v593
      %v692 = vunpack.c.l.b16 %v594
      %v693 = vunpack.c.l.b16 %v595
      %v694 = vunpack.c.l.b16 %v596
      %v695 = vunpack.c.l.b16 %v597
      %v696 = vunpack.c.l.b16 %v598
      %v697 = vunpack.c.l.b16 %v599
      %v698 = vunpack.c.l.b16 %v600
      %v699 = vunpack.c.l.b16 %v601
      %v700 = vunpack.c.l.b16 %v602
      %v701 = vunpack.c.l.b16 %v603
      %v702 = vunpack.c.l.b16 %v604
      %v703 = vunpack.c.l.b16 %v605
      %v704 = vunpack.c.l.b16 %v606
      %v705 = vunpack.c.l.b16 %v607
      %v706 = vunpack.c.l.b16 %v608
      %v707 = vunpack.c.l.b16 %v609
      %v708 = vunpack.c.l.b16 %v610
      %v709 = vunpack.c.l.b16 %v611
      %v710 = vunpack.c.l.b16 %v612
      %v711 = vpack.c.b16 %v664, %v663
      %v712 = vpack.c.b16 %v666, %v665
      %v713 = vpack.c.b16 %v668, %v667
      %v714 = vpack.c.b16 %v670, %v669
      %v715 = vpack.c.b16 %v672, %v671
      %v716 = vpack.c.b16 %v674, %v673
      %v717 = vpack.c.b16 %v676, %v675
      %v718 = vpack.c.b16 %v678, %v677
      %v719 = vpack.c.b16 %v680, %v679
      %v720 = vpack.c.b16 %v682, %v681
      %v721 = vpack.c.b16 %v684, %v683
      %v722 = vpack.c.b16 %v686, %v685
      %v723 = vpack.c.b16 %v688, %v687
      %v724 = vpack.c.b16 %v690, %v689
      %v725 = vpack.c.b16 %v692, %v691
      %v726 = vpack.c.b16 %v694, %v693
      %v727 = vpack.c.b16 %v696, %v695
      %v728 = vpack.c.b16 %v698, %v697
      %v729 = vpack.c.b16 %v700, %v699
      %v730 = vpack.c.b16 %v702, %v701
      %v731 = vpack.c.b16 %v704, %v703
      %v732 = vpack.c.b16 %v706, %v705
      %v733 = vpack.c.b16 %v708, %v707
      %v734 = vpack.c.b16 %v710, %v709
      %759 = vmatpush.bf16.msra.mxu0 %v718
      %760 = vmatpush.bf16.msra.mxu0 %v717
      %761 = vmatpush.bf16.msra.mxu0 %v716
      %762 = vmatpush.bf16.msra.mxu0 %v715
      %763 = vmatpush.bf16.msra.mxu0 %v714
      %764 = vmatpush.bf16.msra.mxu0 %v713
      %765 = vmatpush.bf16.msra.mxu0 %v712
      %766 = vmatpush.bf16.msra.mxu0 %v711
      %767 = vmatmul.bf16.gmra.mxu0 %v562
      %v768 = vpop.f32.mrf.mxu0
      %v769 = vadd.f32 %v614, %v768
      %v770 = vpop.f32.mrf.mxu0
      %v771 = vadd.f32 %v614, %v770
      %772 = vdwg.mxu0
      %773 = vmatpush.bf16.msra.mxu0 %v726
      %774 = vmatpush.bf16.msra.mxu0 %v725
      %775 = vmatpush.bf16.msra.mxu0 %v724
      %776 = vmatpush.bf16.msra.mxu0 %v723
      %777 = vmatpush.bf16.msra.mxu0 %v722
      %778 = vmatpush.bf16.msra.mxu0 %v721
      %779 = vmatpush.bf16.msra.mxu0 %v720
      %780 = vmatpush.bf16.msra.mxu0 %v719
      %781 = vmatmul.bf16.gmra.mxu0 %v563
      %v782 = vpop.f32.mrf.mxu0
      %v783 = vadd.f32 %v769, %v782
      %v784 = vpop.f32.mrf.mxu0
      %v785 = vadd.f32 %v771, %v784
      %786 = vdwg.mxu0
      %787 = vmatpush.bf16.msra.mxu0 %v734
      %788 = vmatpush.bf16.msra.mxu0 %v733
      %789 = vmatpush.bf16.msra.mxu0 %v732
      %790 = vmatpush.bf16.msra.mxu0 %v731
      %791 = vmatpush.bf16.msra.mxu0 %v730
      %792 = vmatpush.bf16.msra.mxu0 %v729
      %793 = vmatpush.bf16.msra.mxu0 %v728
      %794 = vmatpush.bf16.msra.mxu0 %v727
      %795 = vmatmul.bf16.gmra.mxu0 %v564
      %v796 = vpop.f32.mrf.mxu0
      %v797 = vadd.f32 %v783, %v796
      %v798 = vpop.f32.mrf.mxu0
      %v799 = vadd.f32 %v785, %v798
      %800 = vdwg.mxu0
      %v801 = vadd.f32 %v797, %v799
      %802 = vadd.xlane.f32.xlu0 %v801
      %v803 = vpop.xlane.xlu0 %802
      %v804 = vrot.slane %v803, 4
      %v805 = vadd.f32 %v803, %v804
      %v806 = vrot.slane %v805, 2
      %v807 = vadd.f32 %v805, %v806
      %v808 = vrot.slane %v807, 1
      %v809 = vadd.f32 %v807, %v808
      %s810 = vtos %v809
      %v811 = vrcp.pop 2048.0
      %v812 = vmul.f32 2048.0, %v811
      %v813 = vsub.f32 1.0, %v812
      %v814 = vmul.f32 %v811, %v813
      %v815 = vadd.f32 %v811, %v814
      %vm816 = vweird.f32 %v811
      %v817 = vsel %vm816, %v811, %v815
      %s818 = vtos %v817
      %s819 = smul.f32 %s810, %s818
      %v820 = vstv %s819
      %v821 = vsub.f32 %v797, %v820
      %v822 = vsub.f32 %v799, %v820
      %v823 = vmul.f32 %v821, %v821
      %v824 = vmul.f32 %v822, %v822
      %v825 = vadd.f32 %v823, %v824
      %826 = vadd.xlane.f32.xlu0 %v825
      %v827 = vpop.xlane.xlu0 %826
      %v828 = vrot.slane %v827, 4
      %v829 = vadd.f32 %v827, %v828
      %v830 = vrot.slane %v829, 2
      %v831 = vadd.f32 %v829, %v830
      %v832 = vrot.slane %v831, 1
      %v833 = vadd.f32 %v831, %v832
      %s834 = vtos %v833
      %v835 = vrcp.pop 2048.0
      %v836 = vmul.f32 2048.0, %v835
      %v837 = vsub.f32 1.0, %v836
      %v838 = vmul.f32 %v835, %v837
      %v839 = vadd.f32 %v835, %v838
      %vm840 = vweird.f32 %v835
      %v841 = vsel %vm840, %v835, %v839
      %s842 = vtos %v841
      %s843 = smul.f32 %s834, %s842
      %s844 = sadd.f32 %s843, 1e-05
      %v845 = vstv %s844
      %v846 = vrsqrt.pop %v845
      %v847 = vmul.f32 %v846, %v845
      %v848 = vmul.f32 %v847, %v846
      %v849 = vmul.f32 0.5, %v848
      %v850 = vsub.f32 1.5, %v849
      %v851 = vmul.f32 %v846, %v850
      %vm852 = vweird.f32 %v845
      %vm853 = vweird.f32 %v846
      %vm854 = vmor %vm852, %vm853
      %v855 = vsel %vm854, %v846, %v851
      %s856 = vtos %v855
      %v857 = vstv %s856
      %v858 = vmul.f32 %v821, %v857
      %v859 = vmul.f32 %v822, %v857
      %v860 = vperm.slane %v613, 1
      %v861 = vmul.f32 %v858, %v860
      %v862 = vmul.f32 %v859, %v860
      %v863 = vperm.slane %v613, 2
      %v864 = vadd.f32 %v861, %v863
      %v865 = vadd.f32 %v862, %v863
      %v866 = vmax.f32 %v864, 0.0
      %v867 = vmax.f32 %v865, 0.0
      %868 = vst [vmem:[%s312] sm:$0xff] %v866
      %869 = vst [vmem:[%s312 + $0x8] sm:$0xff] %v867
      %v870 = vld [vmem:[%s5] sm:$0xf]
      %s871 = scalar_lea.vmem %s5, 4
      %v872 = vld [vmem:[%s871] sm:$0xf]
      %vm873 = vcmask 130048
      %v875 = vsel %vm873, %v870, 0
      %877 = vmatpush.msra.mxu0 0.0
      %878 = vmatpush.msra.mxu0 0.0
      %879 = vmatpush.msra.mxu0 0.0
      %880 = vmatpush.msra.mxu0 0.0
      %881 = vmatpush.msra.mxu0 0.0
      %882 = vmatpush.msra.mxu0 0.0
      %883 = vmatpush.msra.mxu0 0.0
      %884 = vmatpush.msra.mxu0 0.0
      %885 = vmatpush.msra.mxu0 0.0
      %886 = vmatpush.msra.mxu0 0.0
      %887 = vmatpush.msra.mxu0 0.0
      %888 = vmatpush.msra.mxu0 0.0
      %889 = vmatpush.msra.mxu0 0.0
      %890 = vmatpush.msra.mxu0 0.0
      %891 = vmatpush.msra.mxu0 %v867
      %892 = vmatpush.msra.mxu0 %v866
      %893 = vmatmul.f32.gmra.mxu0 %v875
      %v894 = vpop.f32.mrf.mxu0
      %v895 = vadd.f32 0.0, %v894
      %896 = vdwg.mxu0
      %v898 = vsel %vm873, %v872, 0
      %900 = vmatpush.msra.mxu0 0.0
      %901 = vmatpush.msra.mxu0 0.0
      %902 = vmatpush.msra.mxu0 0.0
      %903 = vmatpush.msra.mxu0 0.0
      %904 = vmatpush.msra.mxu0 0.0
      %905 = vmatpush.msra.mxu0 0.0
      %906 = vmatpush.msra.mxu0 0.0
      %907 = vmatpush.msra.mxu0 0.0
      %908 = vmatpush.msra.mxu0 0.0
      %909 = vmatpush.msra.mxu0 0.0
      %910 = vmatpush.msra.mxu0 0.0
      %911 = vmatpush.msra.mxu0 0.0
      %912 = vmatpush.msra.mxu0 0.0
      %913 = vmatpush.msra.mxu0 0.0
      %914 = vmatpush.msra.mxu0 %v867
      %915 = vmatpush.msra.mxu0 %v866
      %916 = vmatmul.f32.gmra.mxu0 %v898
      %v917 = vpop.f32.mrf.mxu0
      %v918 = vadd.f32 0.0, %v917
      %919 = vdwg.mxu0
      %v920 = vmax.f32 %v895, %v918
      %v921 = vld [vmem:[%s6] sm:$0xff]
      %v922 = vld [vmem:[%s6 + $0x8] sm:$0xff]
      %v923 = vld [vmem:[%s6 + $0x10] sm:$0xff]
      %v924 = vld [vmem:[%s6 + $0x18] sm:$0xff]
      %v925 = vld [vmem:[%s6 + $0x20] sm:$0xff]
      %v926 = vld [vmem:[%s6 + $0x28] sm:$0xff]
      %v927 = vld [vmem:[%s6 + $0x30] sm:$0xff]
      %v928 = vld [vmem:[%s6 + $0x38] sm:$0xff]
      %v929 = vld [vmem:[%s6 + $0x40] sm:$0xff]
      %v930 = vld [vmem:[%s6 + $0x48] sm:$0xff]
      %v931 = vld [vmem:[%s6 + $0x50] sm:$0xff]
      %v932 = vld [vmem:[%s6 + $0x58] sm:$0xff]
      %v933 = vld [vmem:[%s6 + $0x60] sm:$0xff]
      %v934 = vld [vmem:[%s6 + $0x68] sm:$0xff]
      %v935 = vld [vmem:[%s6 + $0x70] sm:$0xff]
      %v936 = vld [vmem:[%s6 + $0x78] sm:$0xff]
      %s937 = scalar_lea.vmem %s6, 128
      %v938 = vld [vmem:[%s937] sm:$0xff]
      %v939 = vld [vmem:[%s937 + $0x8] sm:$0xff]
      %v940 = vld [vmem:[%s937 + $0x10] sm:$0xff]
      %v941 = vld [vmem:[%s937 + $0x18] sm:$0xff]
      %v942 = vld [vmem:[%s937 + $0x20] sm:$0xff]
      %v943 = vld [vmem:[%s937 + $0x28] sm:$0xff]
      %v944 = vld [vmem:[%s937 + $0x30] sm:$0xff]
      %v945 = vld [vmem:[%s937 + $0x38] sm:$0xff]
      %v946 = vld [vmem:[%s937 + $0x40] sm:$0xff]
      %v947 = vld [vmem:[%s937 + $0x48] sm:$0xff]
      %v948 = vld [vmem:[%s937 + $0x50] sm:$0xff]
      %v949 = vld [vmem:[%s937 + $0x58] sm:$0xff]
      %v950 = vld [vmem:[%s937 + $0x60] sm:$0xff]
      %v951 = vld [vmem:[%s937 + $0x68] sm:$0xff]
      %v952 = vld [vmem:[%s937 + $0x70] sm:$0xff]
      %v953 = vld [vmem:[%s937 + $0x78] sm:$0xff]
      %954 = vmatpush.msra.mxu0 %v936
      %955 = vmatpush.msra.mxu0 %v935
      %956 = vmatpush.msra.mxu0 %v934
      %957 = vmatpush.msra.mxu0 %v933
      %958 = vmatpush.msra.mxu0 %v932
      %959 = vmatpush.msra.mxu0 %v931
      %960 = vmatpush.msra.mxu0 %v930
      %961 = vmatpush.msra.mxu0 %v929
      %962 = vmatpush.msra.mxu0 %v928
      %963 = vmatpush.msra.mxu0 %v927
      %964 = vmatpush.msra.mxu0 %v926
      %965 = vmatpush.msra.mxu0 %v925
      %966 = vmatpush.msra.mxu0 %v924
      %967 = vmatpush.msra.mxu0 %v923
      %968 = vmatpush.msra.mxu0 %v922
      %969 = vmatpush.msra.mxu0 %v921
      %970 = vmatmul.f32.gmra.mxu0 %v920
      %v971 = vpop.f32.mrf.mxu0
      %v972 = vadd.f32 0.0, %v971
      %973 = vdwg.mxu0
      %974 = vmatpush.msra.mxu0 %v953
      %975 = vmatpush.msra.mxu0 %v952
      %976 = vmatpush.msra.mxu0 %v951
      %977 = vmatpush.msra.mxu0 %v950
      %978 = vmatpush.msra.mxu0 %v949
      %979 = vmatpush.msra.mxu0 %v948
      %980 = vmatpush.msra.mxu0 %v947
      %981 = vmatpush.msra.mxu0 %v946
      %982 = vmatpush.msra.mxu0 %v945
      %983 = vmatpush.msra.mxu0 %v944
      %984 = vmatpush.msra.mxu0 %v943
      %985 = vmatpush.msra.mxu0 %v942
      %986 = vmatpush.msra.mxu0 %v941
      %987 = vmatpush.msra.mxu0 %v940
      %988 = vmatpush.msra.mxu0 %v939
      %989 = vmatpush.msra.mxu0 %v938
      %990 = vmatmul.f32.gmra.mxu0 %v920
      %v991 = vpop.f32.mrf.mxu0
      %v992 = vadd.f32 0.0, %v991
      %993 = vdwg.mxu0
      %v994 = vmax.f32 %v972, %v992
      %v995 = vadd.f32 %v994, 0.0
      %s996 = scalar_lea.vmem %s5, 8
      %v997 = vld [vmem:[%s996] sm:$0xf]
      %s998 = scalar_lea.vmem %s5, 12
      %v999 = vld [vmem:[%s998] sm:$0xf]
      %v1001 = vsel %vm873, %v997, 0
      %1003 = vmatpush.msra.mxu0 0.0
      %1004 = vmatpush.msra.mxu0 0.0
      %1005 = vmatpush.msra.mxu0 0.0
      %1006 = vmatpush.msra.mxu0 0.0
      %1007 = vmatpush.msra.mxu0 0.0
      %1008 = vmatpush.msra.mxu0 0.0
      %1009 = vmatpush.msra.mxu0 0.0
      %1010 = vmatpush.msra.mxu0 0.0
      %1011 = vmatpush.msra.mxu0 0.0
      %1012 = vmatpush.msra.mxu0 0.0
      %1013 = vmatpush.msra.mxu0 0.0
      %1014 = vmatpush.msra.mxu0 0.0
      %1015 = vmatpush.msra.mxu0 0.0
      %1016 = vmatpush.msra.mxu0 0.0
      %1017 = vmatpush.msra.mxu0 %v867
      %1018 = vmatpush.msra.mxu0 %v866
      %1019 = vmatmul.f32.gmra.mxu0 %v1001
      %v1020 = vpop.f32.mrf.mxu0
      %v1021 = vadd.f32 0.0, %v1020
      %1022 = vdwg.mxu0
      %v1024 = vsel %vm873, %v999, 0
      %1026 = vmatpush.msra.mxu0 0.0
      %1027 = vmatpush.msra.mxu0 0.0
      %1028 = vmatpush.msra.mxu0 0.0
      %1029 = vmatpush.msra.mxu0 0.0
      %1030 = vmatpush.msra.mxu0 0.0
      %1031 = vmatpush.msra.mxu0 0.0
      %1032 = vmatpush.msra.mxu0 0.0
      %1033 = vmatpush.msra.mxu0 0.0
      %1034 = vmatpush.msra.mxu0 0.0
      %1035 = vmatpush.msra.mxu0 0.0
      %1036 = vmatpush.msra.mxu0 0.0
      %1037 = vmatpush.msra.mxu0 0.0
      %1038 = vmatpush.msra.mxu0 0.0
      %1039 = vmatpush.msra.mxu0 0.0
      %1040 = vmatpush.msra.mxu0 %v867
      %1041 = vmatpush.msra.mxu0 %v866
      %1042 = vmatmul.f32.gmra.mxu0 %v1024
      %v1043 = vpop.f32.mrf.mxu0
      %v1044 = vadd.f32 0.0, %v1043
      %1045 = vdwg.mxu0
      %v1046 = vmax.f32 %v1021, %v1044
      %s1047 = scalar_lea.vmem %s6, 256
      %v1048 = vld [vmem:[%s1047] sm:$0xff]
      %v1049 = vld [vmem:[%s1047 + $0x8] sm:$0xff]
      %v1050 = vld [vmem:[%s1047 + $0x10] sm:$0xff]
      %v1051 = vld [vmem:[%s1047 + $0x18] sm:$0xff]
      %v1052 = vld [vmem:[%s1047 + $0x20] sm:$0xff]
      %v1053 = vld [vmem:[%s1047 + $0x28] sm:$0xff]
      %v1054 = vld [vmem:[%s1047 + $0x30] sm:$0xff]
      %v1055 = vld [vmem:[%s1047 + $0x38] sm:$0xff]
      %v1056 = vld [vmem:[%s1047 + $0x40] sm:$0xff]
      %v1057 = vld [vmem:[%s1047 + $0x48] sm:$0xff]
      %v1058 = vld [vmem:[%s1047 + $0x50] sm:$0xff]
      %v1059 = vld [vmem:[%s1047 + $0x58] sm:$0xff]
      %v1060 = vld [vmem:[%s1047 + $0x60] sm:$0xff]
      %v1061 = vld [vmem:[%s1047 + $0x68] sm:$0xff]
      %v1062 = vld [vmem:[%s1047 + $0x70] sm:$0xff]
      %v1063 = vld [vmem:[%s1047 + $0x78] sm:$0xff]
      %s1064 = scalar_lea.vmem %s6, 384
      %v1065 = vld [vmem:[%s1064] sm:$0xff]
      %v1066 = vld [vmem:[%s1064 + $0x8] sm:$0xff]
      %v1067 = vld [vmem:[%s1064 + $0x10] sm:$0xff]
      %v1068 = vld [vmem:[%s1064 + $0x18] sm:$0xff]
      %v1069 = vld [vmem:[%s1064 + $0x20] sm:$0xff]
      %v1070 = vld [vmem:[%s1064 + $0x28] sm:$0xff]
      %v1071 = vld [vmem:[%s1064 + $0x30] sm:$0xff]
      %v1072 = vld [vmem:[%s1064 + $0x38] sm:$0xff]
      %v1073 = vld [vmem:[%s1064 + $0x40] sm:$0xff]
      %v1074 = vld [vmem:[%s1064 + $0x48] sm:$0xff]
      %v1075 = vld [vmem:[%s1064 + $0x50] sm:$0xff]
      %v1076 = vld [vmem:[%s1064 + $0x58] sm:$0xff]
      %v1077 = vld [vmem:[%s1064 + $0x60] sm:$0xff]
      %v1078 = vld [vmem:[%s1064 + $0x68] sm:$0xff]
      %v1079 = vld [vmem:[%s1064 + $0x70] sm:$0xff]
      %v1080 = vld [vmem:[%s1064 + $0x78] sm:$0xff]
      %1081 = vmatpush.msra.mxu0 %v1063
      %1082 = vmatpush.msra.mxu0 %v1062
      %1083 = vmatpush.msra.mxu0 %v1061
      %1084 = vmatpush.msra.mxu0 %v1060
      %1085 = vmatpush.msra.mxu0 %v1059
      %1086 = vmatpush.msra.mxu0 %v1058
      %1087 = vmatpush.msra.mxu0 %v1057
      %1088 = vmatpush.msra.mxu0 %v1056
      %1089 = vmatpush.msra.mxu0 %v1055
      %1090 = vmatpush.msra.mxu0 %v1054
      %1091 = vmatpush.msra.mxu0 %v1053
      %1092 = vmatpush.msra.mxu0 %v1052
      %1093 = vmatpush.msra.mxu0 %v1051
      %1094 = vmatpush.msra.mxu0 %v1050
      %1095 = vmatpush.msra.mxu0 %v1049
      %1096 = vmatpush.msra.mxu0 %v1048
      %1097 = vmatmul.f32.gmra.mxu0 %v1046
      %v1098 = vpop.f32.mrf.mxu0
      %v1099 = vadd.f32 0.0, %v1098
      %1100 = vdwg.mxu0
      %1101 = vmatpush.msra.mxu0 %v1080
      %1102 = vmatpush.msra.mxu0 %v1079
      %1103 = vmatpush.msra.mxu0 %v1078
      %1104 = vmatpush.msra.mxu0 %v1077
      %1105 = vmatpush.msra.mxu0 %v1076
      %1106 = vmatpush.msra.mxu0 %v1075
      %1107 = vmatpush.msra.mxu0 %v1074
      %1108 = vmatpush.msra.mxu0 %v1073
      %1109 = vmatpush.msra.mxu0 %v1072
      %1110 = vmatpush.msra.mxu0 %v1071
      %1111 = vmatpush.msra.mxu0 %v1070
      %1112 = vmatpush.msra.mxu0 %v1069
      %1113 = vmatpush.msra.mxu0 %v1068
      %1114 = vmatpush.msra.mxu0 %v1067
      %1115 = vmatpush.msra.mxu0 %v1066
      %1116 = vmatpush.msra.mxu0 %v1065
      %1117 = vmatmul.f32.gmra.mxu0 %v1046
      %v1118 = vpop.f32.mrf.mxu0
      %v1119 = vadd.f32 0.0, %v1118
      %1120 = vdwg.mxu0
      %v1121 = vmax.f32 %v1099, %v1119
      %v1122 = vadd.f32 %v995, %v1121
      %1123 = vst [vmem:[%s316] sm:$0xf] %v1122
      %p1124 = scmp.lt.s32.totalorder %s20, 1
      %s1125 = scalar_select %p1124, %s20, 1
      %s1126 = smul.addr %s1125, 2
      %s1127 = smul.addr %s1126, 8
      %s1128 = scalar_lea.vmem %s7, %s1127
      %p1129 = scmp.lt.s32.totalorder %s20, 1
      %s1130 = scalar_select %p1129, %s20, 1
      %s1131 = smul.addr %s1130, 4
      %s1132 = scalar_lea.vmem %s8, %s1131
      // Predicated region
      $region49: #{stack_encoder_norm.1} parent=47 // pred_check
        %p1133 = pneg %p190
      $region50: #{stack_encoder_norm.1} parent=47 // pred_check_branch
        %1135 = sbr.rel (%p1133) target = $region52
      $region51: #{stack_encoder_norm.1} parent=47 // pred_region
        _
      $region52: #{stack_encoder_norm.1} parent=47 // pred_fallthru
        _
      // Predicated region
      $region53: #{stack_encoder_norm.1} parent=47 // pred_check
        %p1136 = pneg %p216
      $region54: #{stack_encoder_norm.1} parent=47 // pred_check_branch
        %1138 = sbr.rel (%p1136) target = $region56
      $region55: #{stack_encoder_norm.1} parent=47 // pred_region
        _
      $region56: #{stack_encoder_norm.1} parent=47 // pred_fallthru
        _
    $region48: #{stack_encoder_norm.1} parent=5 // pred_fallthru
      _
    %p1139 = scmp.le.s32.totalorder 2, %s15
    // Predicated region
    $region57: #{stack_encoder_norm.1} parent=5 // pred_check
      %p1140 = pneg %p1139
    $region58: #{stack_encoder_norm.1} parent=5 // pred_check_branch
      %1142 = sbr.rel (%p1140) target = $region60
    $region59: #{stack_encoder_norm.1} parent=5 // pred_region
      %s1143 = ssub.s32 %s15, 2
      // Predicated region
      $region61: #{stack_encoder_norm.1} parent=59 // pred_check
        %p1144 = pneg %p196
      $region62: #{stack_encoder_norm.1} parent=59 // pred_check_branch
        %1146 = sbr.rel (%p1144) target = $region64
      $region63: #{stack_encoder_norm.1} parent=59 // pred_region
        %p1147 = scmp.lt.s32.totalorder %s21, 1
        %s1148 = scalar_select %p1147, %s21, 1
        %s1149 = smul.addr %s1148, 2
        %s1150 = smul.addr %s1149, 8
        %s1151 = scalar_lea.vmem %s7, %s1150
      $region64: #{stack_encoder_norm.1} parent=59 // pred_fallthru
        _
      // Predicated region
      $region65: #{stack_encoder_norm.1} parent=59 // pred_check
        %p1152 = pneg %p222
      $region66: #{stack_encoder_norm.1} parent=59 // pred_check_branch
        %1154 = sbr.rel (%p1152) target = $region68
      $region67: #{stack_encoder_norm.1} parent=59 // pred_region
        %p1155 = scmp.lt.s32.totalorder %s21, 1
        %s1156 = scalar_select %p1155, %s21, 1
        %s1157 = smul.addr %s1156, 4
        %s1158 = scalar_lea.vmem %s8, %s1157
      $region68: #{stack_encoder_norm.1} parent=59 // pred_fallthru
        _
    $region60: #{stack_encoder_norm.1} parent=5 // pred_fallthru
      _
  $region6: #{stack_encoder_norm.1} parent=0 // loop_footer
    %s19 = sadd.s32 1, %s15
  $region7: #{stack_encoder_norm.1} parent=0 // loop_footer_branch
    %14 = sbr.rel target = $region3
  $region8: #{stack_encoder_norm.1} parent=0 // loop_exit
    _

</llo_original>
